<compile_context>
chip_gen: v6e
topology: v6e:2x2x1
jax: 0.10.0
libtpu: 0.0.40
codegen_flags: <defaults>
</compile_context>

<pallas_src>
import functools

import jax
import jax.numpy as jnp
import numpy as np
from jax.experimental import pallas as pl
from jax.experimental.pallas import tpu as pltpu


def _round_up(v, m):
    return (v + m - 1) // m * m


# ------------------------------ Pallas kernel ------------------------------ #

def _basic_block_kernel(xpad_ref, mask_ref, w1_ref, b1_ref, w2_ref, b2_ref,
                        o_ref, col_ref, y1pad_ref, *, W, FRONT):
    """Fused BasicBlock for B_blk images per grid step.

    xpad_ref : (B, Cin, Mpad) bf16   flattened spatial axis, zero-padded
    mask_ref : (2, M)         bf16   row-wrap masks for dx=0 / dx=2 taps
    w1_ref   : (C, 9*Cin)     bf16   conv1 weights (BN1 scale folded), tap-major
    b1_ref   : (C, 1)         f32    folded BN1 bias
    w2_ref   : (C, 9*C)       bf16   conv2 weights (BN2 scale folded), tap-major
    b2_ref   : (C, 1)         f32    folded BN2 bias
    o_ref    : (B, C, M)      bf16   output (NCHW once reshaped)
    col_ref  : (9*Cin, B*M)   bf16   VMEM scratch: im2col slab (reused per conv)
    y1pad_ref: (B, C, Mpad)   bf16   VMEM scratch: padded conv1 output
    """
    B, C, Mpad = y1pad_ref.shape
    Cin = xpad_ref.shape[1]
    M = o_ref.shape[-1]
    BACK = Mpad - FRONT - M

    # Pad strips of the conv1-output scratch must be zero (top/bottom-row taps
    # read them).  Interior is fully rewritten below, so only the thin strips
    # are cleared (done every step so megacore-parallel grids stay correct).
    y1pad_ref[:, :, :FRONT] = jnp.zeros((B, C, FRONT), y1pad_ref.dtype)
    y1pad_ref[:, :, FRONT + M:] = jnp.zeros((B, C, BACK), y1pad_ref.dtype)

    # Hoisted broadcasts of the row-wrap masks (JAX does not CSE broadcasts).
    mask_l = jnp.broadcast_to(mask_ref[0:1, :], (Cin, M))
    mask_r = jnp.broadcast_to(mask_ref[1:2, :], (Cin, M))

    def build_col(src):
        """Fill col_ref with the 9 shifted (and masked) tap copies per image."""
        for dy in range(3):
            for dx in range(3):
                t = dy * 3 + dx
                s = FRONT - W - 1 + dy * W + dx
                for b in range(B):
                    tap = src(b, s)                      # (Cin, M) bf16
                    if dx == 0:        # left tap invalid at w == 0
                        tap = tap * mask_l
                    elif dx == 2:      # right tap invalid at w == W - 1
                        tap = tap * mask_r
                    col_ref[t * Cin:(t + 1) * Cin, b * M:(b + 1) * M] = tap

    # ---- conv1 -> bn1 (scale folded into w1) -> relu ------------------------
    build_col(lambda b, s: xpad_ref[b, :, s:s + M])
    acc1 = jnp.dot(w1_ref[...], col_ref[...], preferred_element_type=jnp.float32)
    y1 = jnp.maximum(acc1 + b1_ref[...], 0.0)            # (C, B*M) f32
    for b in range(B):
        y1pad_ref[b, :, FRONT:FRONT + M] = (
            y1[:, b * M:(b + 1) * M].astype(y1pad_ref.dtype))

    # ---- conv2 -> bn2 -> + identity -> relu ---------------------------------
    build_col(lambda b, s: y1pad_ref[b, :, s:s + M])
    acc2 = jnp.dot(w2_ref[...], col_ref[...], preferred_element_type=jnp.float32)
    acc2 = acc2 + b2_ref[...]
    for b in range(B):
        # TODO(synk): residual is the bf16-downcast input (reference adds f32 x);
        # feed a separate f32 x block if bit-closer parity is ever required.
        identity = xpad_ref[b, :, FRONT:FRONT + M].astype(jnp.float32)
        o_ref[b] = jnp.maximum(acc2[:, b * M:(b + 1) * M] + identity,
                               0.0).astype(o_ref.dtype)


# ------------------------------- JAX wrapper -------------------------------- #

def _fold_bn(gamma, beta, mean, var, eps=1e-5):
    scale = gamma / jnp.sqrt(var + eps)
    bias = beta - mean * scale
    return scale, bias


def _pack_conv_weight(w_oihw, scale):
    """PyTorch (Cout, Cin, 3, 3) -> (Cout, 9*Cin) bf16 (tap-major), BN folded."""
    w = w_oihw * scale[:, None, None, None]
    cout, cin = w.shape[0], w.shape[1]
    return jnp.transpose(w, (0, 2, 3, 1)).reshape(cout, 9 * cin).astype(jnp.bfloat16)


def basic_block_forward(x_nchw, params, out_dtype=jnp.bfloat16):
    """BasicBlock forward (stride=1, downsample=None, eval-mode BatchNorm)."""
    # TODO(synk): stride>1 / downsample branch and training-mode BN batch stats
    # are not implemented (not exercised by this configuration).
    N, Cin, H, W = x_nchw.shape
    C = params["w1_pt"].shape[0]
    if Cin != C:
        raise ValueError("BasicBlock without downsample requires in_channel == channel")

    M = H * W
    FRONT = _round_up(W + 1, 128)                 # lane-aligned front pad (>= W+1)
    Mpad = _round_up(FRONT + M + W + 1, 128)      # back pad >= W+1, total aligned

    s1, b1 = _fold_bn(params["g1"], params["b1"], params["m1"], params["v1"])
    s2, b2 = _fold_bn(params["g2"], params["b2"], params["m2"], params["v2"])
    w1 = _pack_conv_weight(params["w1_pt"], s1)   # (C, 9*Cin) bf16
    w2 = _pack_conv_weight(params["w2_pt"], s2)   # (C, 9*C)   bf16
    b1 = b1.reshape(C, 1).astype(jnp.float32)
    b2 = b2.reshape(C, 1).astype(jnp.float32)

    # NCHW -> (N, C, H*W) is a pure reshape (no transpose).  Zero-pad the flat
    # spatial axis so every 3x3 tap is a static lane slice of the slab.
    x_flat = x_nchw.reshape(N, Cin, M).astype(jnp.bfloat16)
    xpad = jnp.pad(x_flat, ((0, 0), (0, 0), (FRONT, Mpad - FRONT - M)))

    # Row-wrap masks for the horizontal taps.
    w_idx = jnp.arange(M, dtype=jnp.int32) % W
    masks = jnp.stack([(w_idx != 0), (w_idx != W - 1)]).astype(jnp.bfloat16)  # (2, M)

    # Fold several batch images into the matmul lane dimension per grid step.
    lane_budget = 2048
    B_blk = max(1, min(N, lane_budget // max(M, 1)))
    while N % B_blk:
        B_blk -= 1
    # TODO(synk): for very large H*W on v7x (64 MiB VMEM) add a spatial grid
    # axis with a 2-row halo instead of taking the full H*W slab per step.

    # Explicit VMEM accounting: double-buffered pipeline blocks + scratch.
    itemsize_out = jnp.dtype(out_dtype).itemsize
    blk_bytes = (B_blk * Cin * Mpad * 2            # xpad block (bf16)
                 + B_blk * C * M * itemsize_out    # output block
                 + 2 * M * 2                       # masks
                 + 9 * C * (Cin + C) * 2           # packed weights
                 + 2 * C * 4)                      # biases
    scratch_bytes = 9 * Cin * B_blk * M * 2 + B_blk * C * Mpad * 2
    vmem_limit = int(min(max(2 * (2 * blk_bytes + scratch_bytes),
                             32 * 1024 * 1024), 100 * 1024 * 1024))

    kernel = functools.partial(_basic_block_kernel, W=W, FRONT=FRONT)
    out = pl.pallas_call(
        kernel,
        out_shape=jax.ShapeDtypeStruct((N, C, M), out_dtype),
        grid=(N // B_blk,),
        in_specs=[
            pl.BlockSpec((B_blk, Cin, Mpad), lambda n: (n, 0, 0)),  # x (padded, flat)
            pl.BlockSpec((2, M), lambda n: (0, 0)),                 # dx masks
            pl.BlockSpec((C, 9 * Cin), lambda n: (0, 0)),           # w1 packed
            pl.BlockSpec((C, 1), lambda n: (0, 0)),                 # b1
            pl.BlockSpec((C, 9 * C), lambda n: (0, 0)),             # w2 packed
            pl.BlockSpec((C, 1), lambda n: (0, 0)),                 # b2
        ],
        out_specs=pl.BlockSpec((B_blk, C, M), lambda n: (n, 0, 0)),
        scratch_shapes=[
            pltpu.VMEM((9 * Cin, B_blk * M), jnp.bfloat16),  # im2col slab
            pltpu.VMEM((B_blk, C, Mpad), jnp.bfloat16),      # padded conv1 output
        ],
        compiler_params=pltpu.CompilerParams(
            dimension_semantics=("parallel",),
            vmem_limit_bytes=vmem_limit,
        ),
    )(xpad, masks, w1, b1, w2, b2)

    return out.reshape(N, C, H, W)                                # already NCHW


# --------------------------- parameter init / ref --------------------------- #

def init_basic_block_params(key, in_channel, channel):
    ks = jax.random.split(key, 10)
    p = {}
    p["w1_pt"] = 0.1 * jax.random.normal(ks[0], (channel, in_channel, 3, 3), jnp.float32)
    p["w2_pt"] = 0.1 * jax.random.normal(ks[1], (channel, channel, 3, 3), jnp.float32)
    p["g1"] = jax.random.uniform(ks[2], (channel,), jnp.float32, 0.5, 1.5)
    p["b1"] = 0.1 * jax.random.normal(ks[3], (channel,), jnp.float32)
    p["m1"] = 0.1 * jax.random.normal(ks[4], (channel,), jnp.float32)
    p["v1"] = jax.random.uniform(ks[5], (channel,), jnp.float32, 0.5, 1.5)
    p["g2"] = jax.random.uniform(ks[6], (channel,), jnp.float32, 0.5, 1.5)
    p["b2"] = 0.1 * jax.random.normal(ks[7], (channel,), jnp.float32)
    p["m2"] = 0.1 * jax.random.normal(ks[8], (channel,), jnp.float32)
    p["v2"] = jax.random.uniform(ks[9], (channel,), jnp.float32, 0.5, 1.5)
    return p


def _reference_forward(x_nchw, params, eps=1e-5):
    def conv(x, w):
        return jax.lax.conv_general_dilated(
            x, w, window_strides=(1, 1), padding=((1, 1), (1, 1)),
            dimension_numbers=("NCHW", "OIHW", "NCHW"))

    def bn(x, g, b, m, v):
        g = g[None, :, None, None]; b = b[None, :, None, None]
        m = m[None, :, None, None]; v = v[None, :, None, None]
        return (x - m) / jnp.sqrt(v + eps) * g + b

    identity = x_nchw
    o = conv(x_nchw, params["w1_pt"])
    o = jnp.maximum(bn(o, params["g1"], params["b1"], params["m1"], params["v1"]), 0.0)
    o = conv(o, params["w2_pt"])
    o = bn(o, params["g2"], params["b2"], params["m2"], params["v2"]) + identity
    return jnp.maximum(o, 0.0)


# ----------------------------------- main ----------------------------------- #

if __name__ == "__main__":
    N, C, H, W = 2, 8, 16, 16          # in_channel == channel (no downsample)
    key = jax.random.PRNGKey(0)
    kx, kp = jax.random.split(key)
    x = jax.random.normal(kx, (N, C, H, W), jnp.float32)
    params = init_basic_block_params(kp, C, C)

    out = jax.block_until_ready(basic_block_forward(x, params))
    ref = jax.block_until_ready(_reference_forward(x, params))

    assert out.shape == (N, C, H, W)
    np.testing.assert_allclose(np.asarray(out.astype(jnp.float32)), np.asarray(ref),
                               rtol=2e-2, atol=2e-2)
    print("KERNEL_OK")
</pallas_src>

<mosaic_0001>
module attributes {stable_mosaic.version = 11 : i64} {
  func.func @_basic_block_kernel(%arg0: i32, %arg1: memref<2x8x512xbf16, #tpu.memory_space<vmem>>, %arg2: memref<2x256xbf16, #tpu.memory_space<vmem>>, %arg3: memref<8x72xbf16, #tpu.memory_space<vmem>>, %arg4: memref<8x1xf32, #tpu.memory_space<vmem>>, %arg5: memref<8x72xbf16, #tpu.memory_space<vmem>>, %arg6: memref<8x1xf32, #tpu.memory_space<vmem>>, %arg7: memref<2x8x256xbf16, #tpu.memory_space<vmem>>, %arg8: memref<72x512xbf16, #tpu.memory_space<vmem>>, %arg9: memref<2x8x512xbf16, #tpu.memory_space<vmem>>) attributes {dimension_semantics = [#tpu.dimension_semantics<parallel>], iteration_bounds = array<i64: 1>, scalar_prefetch = 0 : i64, scratch_operands = 2 : i64, tpu.core_type = #tpu.core_type<tc>, window_params = [{transform_indices = @transform_0, window_bounds = array<i64: 2, 8, 512>}, {pipeline_mode = #tpu.pipeline_mode<synchronous>, transform_indices = @transform_1, window_bounds = array<i64: 2, 256>}, {pipeline_mode = #tpu.pipeline_mode<synchronous>, transform_indices = @transform_2, window_bounds = array<i64: 8, 72>}, {pipeline_mode = #tpu.pipeline_mode<synchronous>, transform_indices = @transform_3, window_bounds = array<i64: 8, 1>}, {pipeline_mode = #tpu.pipeline_mode<synchronous>, transform_indices = @transform_4, window_bounds = array<i64: 8, 72>}, {pipeline_mode = #tpu.pipeline_mode<synchronous>, transform_indices = @transform_5, window_bounds = array<i64: 8, 1>}, {transform_indices = @transform_6, window_bounds = array<i64: 2, 8, 256>}]} {
    %cst = arith.constant 0.000000e+00 : bf16
    %0 = vector.broadcast %cst : bf16 to vector<2x8x128xbf16>
    %c0 = arith.constant 0 : index
    %c0_0 = arith.constant 0 : index
    %c0_1 = arith.constant 0 : index
    %1 = vector.load %arg9[%c0, %c0_0, %c0_1] : memref<2x8x512xbf16, #tpu.memory_space<vmem>>, vector<2x8x128xbf16>
    tpu.vector_store %arg9[%c0, %c0_0, %c0_1], %0 {strides = array<i32>} : memref<2x8x512xbf16, #tpu.memory_space<vmem>>, vector<2x8x128xbf16>,
    %cst_2 = arith.constant 0.000000e+00 : bf16
    %2 = vector.broadcast %cst_2 : bf16 to vector<2x8x128xbf16>
    %c0_3 = arith.constant 0 : index
    %c0_4 = arith.constant 0 : index
    %c384 = arith.constant 384 : index
    %3 = vector.load %arg9[%c0_3, %c0_4, %c384] : memref<2x8x512xbf16, #tpu.memory_space<vmem>>, vector<2x8x128xbf16>
    tpu.vector_store %arg9[%c0_3, %c0_4, %c384], %2 {strides = array<i32>} : memref<2x8x512xbf16, #tpu.memory_space<vmem>>, vector<2x8x128xbf16>,
    %c0_5 = arith.constant 0 : index
    %c0_6 = arith.constant 0 : index
    %4 = vector.load %arg2[%c0_5, %c0_6] : memref<2x256xbf16, #tpu.memory_space<vmem>>, vector<1x256xbf16>
    %5 = vector.shape_cast %4 : vector<1x256xbf16> to vector<1x256xbf16>
    %6 = vector.broadcast %5 : vector<1x256xbf16> to vector<8x256xbf16>
    %c1 = arith.constant 1 : index
    %c0_7 = arith.constant 0 : index
    %7 = vector.load %arg2[%c1, %c0_7] : memref<2x256xbf16, #tpu.memory_space<vmem>>, vector<1x256xbf16>
    %8 = vector.shape_cast %7 : vector<1x256xbf16> to vector<1x256xbf16>
    %9 = vector.broadcast %8 : vector<1x256xbf16> to vector<8x256xbf16>
    %c0_8 = arith.constant 0 : index
    %c0_9 = arith.constant 0 : index
    %c111 = arith.constant 111 : index
    %10 = vector.load %arg1[%c0_8, %c0_9, %c111] : memref<2x8x512xbf16, #tpu.memory_space<vmem>>, vector<1x8x256xbf16>
    %11 = vector.shape_cast %10 : vector<1x8x256xbf16> to vector<8x256xbf16>
    %12 = arith.mulf %11, %6 : vector<8x256xbf16>
    %c0_10 = arith.constant 0 : index
    %c0_11 = arith.constant 0 : index
    %13 = vector.load %arg8[%c0_10, %c0_11] : memref<72x512xbf16, #tpu.memory_space<vmem>>, vector<8x256xbf16>
    tpu.vector_store %arg8[%c0_10, %c0_11], %12 {strides = array<i32>} : memref<72x512xbf16, #tpu.memory_space<vmem>>, vector<8x256xbf16>,
    %c1_12 = arith.constant 1 : index
    %c0_13 = arith.constant 0 : index
    %c111_14 = arith.constant 111 : index
    %14 = vector.load %arg1[%c1_12, %c0_13, %c111_14] : memref<2x8x512xbf16, #tpu.memory_space<vmem>>, vector<1x8x256xbf16>
    %15 = vector.shape_cast %14 : vector<1x8x256xbf16> to vector<8x256xbf16>
    %16 = arith.mulf %15, %6 : vector<8x256xbf16>
    %c0_15 = arith.constant 0 : index
    %c256 = arith.constant 256 : index
    %17 = vector.load %arg8[%c0_15, %c256] : memref<72x512xbf16, #tpu.memory_space<vmem>>, vector<8x256xbf16>
    tpu.vector_store %arg8[%c0_15, %c256], %16 {strides = array<i32>} : memref<72x512xbf16, #tpu.memory_space<vmem>>, vector<8x256xbf16>,
    %c0_16 = arith.constant 0 : index
    %c0_17 = arith.constant 0 : index
    %c112 = arith.constant 112 : index
    %18 = vector.load %arg1[%c0_16, %c0_17, %c112] : memref<2x8x512xbf16, #tpu.memory_space<vmem>>, vector<1x8x256xbf16>
    %19 = vector.shape_cast %18 : vector<1x8x256xbf16> to vector<8x256xbf16>
    %c8 = arith.constant 8 : index
    %c0_18 = arith.constant 0 : index
    %20 = vector.load %arg8[%c8, %c0_18] : memref<72x512xbf16, #tpu.memory_space<vmem>>, vector<8x256xbf16>
    tpu.vector_store %arg8[%c8, %c0_18], %19 {strides = array<i32>} : memref<72x512xbf16, #tpu.memory_space<vmem>>, vector<8x256xbf16>,
    %c1_19 = arith.constant 1 : index
    %c0_20 = arith.constant 0 : index
    %c112_21 = arith.constant 112 : index
    %21 = vector.load %arg1[%c1_19, %c0_20, %c112_21] : memref<2x8x512xbf16, #tpu.memory_space<vmem>>, vector<1x8x256xbf16>
    %22 = vector.shape_cast %21 : vector<1x8x256xbf16> to vector<8x256xbf16>
    %c8_22 = arith.constant 8 : index
    %c256_23 = arith.constant 256 : index
    %23 = vector.load %arg8[%c8_22, %c256_23] : memref<72x512xbf16, #tpu.memory_space<vmem>>, vector<8x256xbf16>
    tpu.vector_store %arg8[%c8_22, %c256_23], %22 {strides = array<i32>} : memref<72x512xbf16, #tpu.memory_space<vmem>>, vector<8x256xbf16>,
    %c0_24 = arith.constant 0 : index
    %c0_25 = arith.constant 0 : index
    %c113 = arith.constant 113 : index
    %24 = vector.load %arg1[%c0_24, %c0_25, %c113] : memref<2x8x512xbf16, #tpu.memory_space<vmem>>, vector<1x8x256xbf16>
    %25 = vector.shape_cast %24 : vector<1x8x256xbf16> to vector<8x256xbf16>
    %26 = arith.mulf %25, %9 : vector<8x256xbf16>
    %c16 = arith.constant 16 : index
    %c0_26 = arith.constant 0 : index
    %27 = vector.load %arg8[%c16, %c0_26] : memref<72x512xbf16, #tpu.memory_space<vmem>>, vector<8x256xbf16>
    tpu.vector_store %arg8[%c16, %c0_26], %26 {strides = array<i32>} : memref<72x512xbf16, #tpu.memory_space<vmem>>, vector<8x256xbf16>,
    %c1_27 = arith.constant 1 : index
    %c0_28 = arith.constant 0 : index
    %c113_29 = arith.constant 113 : index
    %28 = vector.load %arg1[%c1_27, %c0_28, %c113_29] : memref<2x8x512xbf16, #tpu.memory_space<vmem>>, vector<1x8x256xbf16>
    %29 = vector.shape_cast %28 : vector<1x8x256xbf16> to vector<8x256xbf16>
    %30 = arith.mulf %29, %9 : vector<8x256xbf16>
    %c16_30 = arith.constant 16 : index
    %c256_31 = arith.constant 256 : index
    %31 = vector.load %arg8[%c16_30, %c256_31] : memref<72x512xbf16, #tpu.memory_space<vmem>>, vector<8x256xbf16>
    tpu.vector_store %arg8[%c16_30, %c256_31], %30 {strides = array<i32>} : memref<72x512xbf16, #tpu.memory_space<vmem>>, vector<8x256xbf16>,
    %c0_32 = arith.constant 0 : index
    %c0_33 = arith.constant 0 : index
    %c127 = arith.constant 127 : index
    %32 = vector.load %arg1[%c0_32, %c0_33, %c127] : memref<2x8x512xbf16, #tpu.memory_space<vmem>>, vector<1x8x256xbf16>
    %33 = vector.shape_cast %32 : vector<1x8x256xbf16> to vector<8x256xbf16>
    %34 = arith.mulf %33, %6 : vector<8x256xbf16>
    %c24 = arith.constant 24 : index
    %c0_34 = arith.constant 0 : index
    %35 = vector.load %arg8[%c24, %c0_34] : memref<72x512xbf16, #tpu.memory_space<vmem>>, vector<8x256xbf16>
    tpu.vector_store %arg8[%c24, %c0_34], %34 {strides = array<i32>} : memref<72x512xbf16, #tpu.memory_space<vmem>>, vector<8x256xbf16>,
    %c1_35 = arith.constant 1 : index
    %c0_36 = arith.constant 0 : index
    %c127_37 = arith.constant 127 : index
    %36 = vector.load %arg1[%c1_35, %c0_36, %c127_37] : memref<2x8x512xbf16, #tpu.memory_space<vmem>>, vector<1x8x256xbf16>
    %37 = vector.shape_cast %36 : vector<1x8x256xbf16> to vector<8x256xbf16>
    %38 = arith.mulf %37, %6 : vector<8x256xbf16>
    %c24_38 = arith.constant 24 : index
    %c256_39 = arith.constant 256 : index
    %39 = vector.load %arg8[%c24_38, %c256_39] : memref<72x512xbf16, #tpu.memory_space<vmem>>, vector<8x256xbf16>
    tpu.vector_store %arg8[%c24_38, %c256_39], %38 {strides = array<i32>} : memref<72x512xbf16, #tpu.memory_space<vmem>>, vector<8x256xbf16>,
    %c0_40 = arith.constant 0 : index
    %c0_41 = arith.constant 0 : index
    %c128 = arith.constant 128 : index
    %40 = vector.load %arg1[%c0_40, %c0_41, %c128] : memref<2x8x512xbf16, #tpu.memory_space<vmem>>, vector<1x8x256xbf16>
    %41 = vector.shape_cast %40 : vector<1x8x256xbf16> to vector<8x256xbf16>
    %c32 = arith.constant 32 : index
    %c0_42 = arith.constant 0 : index
    %42 = vector.load %arg8[%c32, %c0_42] : memref<72x512xbf16, #tpu.memory_space<vmem>>, vector<8x256xbf16>
    tpu.vector_store %arg8[%c32, %c0_42], %41 {strides = array<i32>} : memref<72x512xbf16, #tpu.memory_space<vmem>>, vector<8x256xbf16>,
    %c1_43 = arith.constant 1 : index
    %c0_44 = arith.constant 0 : index
    %c128_45 = arith.constant 128 : index
    %43 = vector.load %arg1[%c1_43, %c0_44, %c128_45] : memref<2x8x512xbf16, #tpu.memory_space<vmem>>, vector<1x8x256xbf16>
    %44 = vector.shape_cast %43 : vector<1x8x256xbf16> to vector<8x256xbf16>
    %c32_46 = arith.constant 32 : index
    %c256_47 = arith.constant 256 : index
    %45 = vector.load %arg8[%c32_46, %c256_47] : memref<72x512xbf16, #tpu.memory_space<vmem>>, vector<8x256xbf16>
    tpu.vector_store %arg8[%c32_46, %c256_47], %44 {strides = array<i32>} : memref<72x512xbf16, #tpu.memory_space<vmem>>, vector<8x256xbf16>,
    %c0_48 = arith.constant 0 : index
    %c0_49 = arith.constant 0 : index
    %c129 = arith.constant 129 : index
    %46 = vector.load %arg1[%c0_48, %c0_49, %c129] : memref<2x8x512xbf16, #tpu.memory_space<vmem>>, vector<1x8x256xbf16>
    %47 = vector.shape_cast %46 : vector<1x8x256xbf16> to vector<8x256xbf16>
    %48 = arith.mulf %47, %9 : vector<8x256xbf16>
    %c40 = arith.constant 40 : index
    %c0_50 = arith.constant 0 : index
    %49 = vector.load %arg8[%c40, %c0_50] : memref<72x512xbf16, #tpu.memory_space<vmem>>, vector<8x256xbf16>
    tpu.vector_store %arg8[%c40, %c0_50], %48 {strides = array<i32>} : memref<72x512xbf16, #tpu.memory_space<vmem>>, vector<8x256xbf16>,
    %c1_51 = arith.constant 1 : index
    %c0_52 = arith.constant 0 : index
    %c129_53 = arith.constant 129 : index
    %50 = vector.load %arg1[%c1_51, %c0_52, %c129_53] : memref<2x8x512xbf16, #tpu.memory_space<vmem>>, vector<1x8x256xbf16>
    %51 = vector.shape_cast %50 : vector<1x8x256xbf16> to vector<8x256xbf16>
    %52 = arith.mulf %51, %9 : vector<8x256xbf16>
    %c40_54 = arith.constant 40 : index
    %c256_55 = arith.constant 256 : index
    %53 = vector.load %arg8[%c40_54, %c256_55] : memref<72x512xbf16, #tpu.memory_space<vmem>>, vector<8x256xbf16>
    tpu.vector_store %arg8[%c40_54, %c256_55], %52 {strides = array<i32>} : memref<72x512xbf16, #tpu.memory_space<vmem>>, vector<8x256xbf16>,
    %c0_56 = arith.constant 0 : index
    %c0_57 = arith.constant 0 : index
    %c143 = arith.constant 143 : index
    %54 = vector.load %arg1[%c0_56, %c0_57, %c143] : memref<2x8x512xbf16, #tpu.memory_space<vmem>>, vector<1x8x256xbf16>
    %55 = vector.shape_cast %54 : vector<1x8x256xbf16> to vector<8x256xbf16>
    %56 = arith.mulf %55, %6 : vector<8x256xbf16>
    %c48 = arith.constant 48 : index
    %c0_58 = arith.constant 0 : index
    %57 = vector.load %arg8[%c48, %c0_58] : memref<72x512xbf16, #tpu.memory_space<vmem>>, vector<8x256xbf16>
    tpu.vector_store %arg8[%c48, %c0_58], %56 {strides = array<i32>} : memref<72x512xbf16, #tpu.memory_space<vmem>>, vector<8x256xbf16>,
    %c1_59 = arith.constant 1 : index
    %c0_60 = arith.constant 0 : index
    %c143_61 = arith.constant 143 : index
    %58 = vector.load %arg1[%c1_59, %c0_60, %c143_61] : memref<2x8x512xbf16, #tpu.memory_space<vmem>>, vector<1x8x256xbf16>
    %59 = vector.shape_cast %58 : vector<1x8x256xbf16> to vector<8x256xbf16>
    %60 = arith.mulf %59, %6 : vector<8x256xbf16>
    %c48_62 = arith.constant 48 : index
    %c256_63 = arith.constant 256 : index
    %61 = vector.load %arg8[%c48_62, %c256_63] : memref<72x512xbf16, #tpu.memory_space<vmem>>, vector<8x256xbf16>
    tpu.vector_store %arg8[%c48_62, %c256_63], %60 {strides = array<i32>} : memref<72x512xbf16, #tpu.memory_space<vmem>>, vector<8x256xbf16>,
    %c0_64 = arith.constant 0 : index
    %c0_65 = arith.constant 0 : index
    %c144 = arith.constant 144 : index
    %62 = vector.load %arg1[%c0_64, %c0_65, %c144] : memref<2x8x512xbf16, #tpu.memory_space<vmem>>, vector<1x8x256xbf16>
    %63 = vector.shape_cast %62 : vector<1x8x256xbf16> to vector<8x256xbf16>
    %c56 = arith.constant 56 : index
    %c0_66 = arith.constant 0 : index
    %64 = vector.load %arg8[%c56, %c0_66] : memref<72x512xbf16, #tpu.memory_space<vmem>>, vector<8x256xbf16>
    tpu.vector_store %arg8[%c56, %c0_66], %63 {strides = array<i32>} : memref<72x512xbf16, #tpu.memory_space<vmem>>, vector<8x256xbf16>,
    %c1_67 = arith.constant 1 : index
    %c0_68 = arith.constant 0 : index
    %c144_69 = arith.constant 144 : index
    %65 = vector.load %arg1[%c1_67, %c0_68, %c144_69] : memref<2x8x512xbf16, #tpu.memory_space<vmem>>, vector<1x8x256xbf16>
    %66 = vector.shape_cast %65 : vector<1x8x256xbf16> to vector<8x256xbf16>
    %c56_70 = arith.constant 56 : index
    %c256_71 = arith.constant 256 : index
    %67 = vector.load %arg8[%c56_70, %c256_71] : memref<72x512xbf16, #tpu.memory_space<vmem>>, vector<8x256xbf16>
    tpu.vector_store %arg8[%c56_70, %c256_71], %66 {strides = array<i32>} : memref<72x512xbf16, #tpu.memory_space<vmem>>, vector<8x256xbf16>,
    %c0_72 = arith.constant 0 : index
    %c0_73 = arith.constant 0 : index
    %c145 = arith.constant 145 : index
    %68 = vector.load %arg1[%c0_72, %c0_73, %c145] : memref<2x8x512xbf16, #tpu.memory_space<vmem>>, vector<1x8x256xbf16>
    %69 = vector.shape_cast %68 : vector<1x8x256xbf16> to vector<8x256xbf16>
    %70 = arith.mulf %69, %9 : vector<8x256xbf16>
    %c64 = arith.constant 64 : index
    %c0_74 = arith.constant 0 : index
    %71 = vector.load %arg8[%c64, %c0_74] : memref<72x512xbf16, #tpu.memory_space<vmem>>, vector<8x256xbf16>
    tpu.vector_store %arg8[%c64, %c0_74], %70 {strides = array<i32>} : memref<72x512xbf16, #tpu.memory_space<vmem>>, vector<8x256xbf16>,
    %c1_75 = arith.constant 1 : index
    %c0_76 = arith.constant 0 : index
    %c145_77 = arith.constant 145 : index
    %72 = vector.load %arg1[%c1_75, %c0_76, %c145_77] : memref<2x8x512xbf16, #tpu.memory_space<vmem>>, vector<1x8x256xbf16>
    %73 = vector.shape_cast %72 : vector<1x8x256xbf16> to vector<8x256xbf16>
    %74 = arith.mulf %73, %9 : vector<8x256xbf16>
    %c64_78 = arith.constant 64 : index
    %c256_79 = arith.constant 256 : index
    %75 = vector.load %arg8[%c64_78, %c256_79] : memref<72x512xbf16, #tpu.memory_space<vmem>>, vector<8x256xbf16>
    tpu.vector_store %arg8[%c64_78, %c256_79], %74 {strides = array<i32>} : memref<72x512xbf16, #tpu.memory_space<vmem>>, vector<8x256xbf16>,
    %c0_80 = arith.constant 0 : index
    %c0_81 = arith.constant 0 : index
    %76 = vector.load %arg3[%c0_80, %c0_81] : memref<8x72xbf16, #tpu.memory_space<vmem>>, vector<8x72xbf16>
    %c0_82 = arith.constant 0 : index
    %c0_83 = arith.constant 0 : index
    %77 = vector.load %arg8[%c0_82, %c0_83] : memref<72x512xbf16, #tpu.memory_space<vmem>>, vector<72x512xbf16>
    %cst_84 = arith.constant dense<0.000000e+00> : vector<8x512xf32>
    %78 = tpu.matmul %76, %77, %cst_84 {dimension_numbers = #tpu.dot_dimension_numbers<[1], [0], [0], [1], [0, 0, 1, 1], [], []>} : vector<8x72xbf16>, vector<72x512xbf16>, vector<8x512xf32> -> vector<8x512xf32>
    %c0_85 = arith.constant 0 : index
    %c0_86 = arith.constant 0 : index
    %79 = vector.load %arg4[%c0_85, %c0_86] : memref<8x1xf32, #tpu.memory_space<vmem>>, vector<8x1xf32>
    %80 = vector.broadcast %79 : vector<8x1xf32> to vector<8x512xf32>
    %81 = arith.addf %78, %80 : vector<8x512xf32>
    %cst_87 = arith.constant 0.000000e+00 : f32
    %82 = vector.broadcast %cst_87 : f32 to vector<8x512xf32>
    %83 = arith.maximumf %81, %82 : vector<8x512xf32>
    %84 = vector.extract_strided_slice %83 {offsets = [0, 0], sizes = [8, 256], strides = [1, 1]} : vector<8x512xf32> to vector<8x256xf32>
    %85 = arith.truncf %84 : vector<8x256xf32> to vector<8x256xbf16>
    %c0_88 = arith.constant 0 : index
    %c0_89 = arith.constant 0 : index
    %c128_90 = arith.constant 128 : index
    %86 = vector.load %arg9[%c0_88, %c0_89, %c128_90] : memref<2x8x512xbf16, #tpu.memory_space<vmem>>, vector<1x8x256xbf16>
    %87 = vector.shape_cast %86 : vector<1x8x256xbf16> to vector<8x256xbf16>
    %88 = vector.shape_cast %85 : vector<8x256xbf16> to vector<1x8x256xbf16>
    tpu.vector_store %arg9[%c0_88, %c0_89, %c128_90], %88 {strides = array<i32>} : memref<2x8x512xbf16, #tpu.memory_space<vmem>>, vector<1x8x256xbf16>,
    %89 = vector.extract_strided_slice %83 {offsets = [0, 256], sizes = [8, 256], strides = [1, 1]} : vector<8x512xf32> to vector<8x256xf32>
    %90 = arith.truncf %89 : vector<8x256xf32> to vector<8x256xbf16>
    %c1_91 = arith.constant 1 : index
    %c0_92 = arith.constant 0 : index
    %c128_93 = arith.constant 128 : index
    %91 = vector.load %arg9[%c1_91, %c0_92, %c128_93] : memref<2x8x512xbf16, #tpu.memory_space<vmem>>, vector<1x8x256xbf16>
    %92 = vector.shape_cast %91 : vector<1x8x256xbf16> to vector<8x256xbf16>
    %93 = vector.shape_cast %90 : vector<8x256xbf16> to vector<1x8x256xbf16>
    tpu.vector_store %arg9[%c1_91, %c0_92, %c128_93], %93 {strides = array<i32>} : memref<2x8x512xbf16, #tpu.memory_space<vmem>>, vector<1x8x256xbf16>,
    %c0_94 = arith.constant 0 : index
    %c0_95 = arith.constant 0 : index
    %c111_96 = arith.constant 111 : index
    %94 = vector.load %arg9[%c0_94, %c0_95, %c111_96] : memref<2x8x512xbf16, #tpu.memory_space<vmem>>, vector<1x8x256xbf16>
    %95 = vector.shape_cast %94 : vector<1x8x256xbf16> to vector<8x256xbf16>
    %96 = arith.mulf %95, %6 : vector<8x256xbf16>
    %c0_97 = arith.constant 0 : index
    %c0_98 = arith.constant 0 : index
    %97 = vector.load %arg8[%c0_97, %c0_98] : memref<72x512xbf16, #tpu.memory_space<vmem>>, vector<8x256xbf16>
    tpu.vector_store %arg8[%c0_97, %c0_98], %96 {strides = array<i32>} : memref<72x512xbf16, #tpu.memory_space<vmem>>, vector<8x256xbf16>,
    %c1_99 = arith.constant 1 : index
    %c0_100 = arith.constant 0 : index
    %c111_101 = arith.constant 111 : index
    %98 = vector.load %arg9[%c1_99, %c0_100, %c111_101] : memref<2x8x512xbf16, #tpu.memory_space<vmem>>, vector<1x8x256xbf16>
    %99 = vector.shape_cast %98 : vector<1x8x256xbf16> to vector<8x256xbf16>
    %100 = arith.mulf %99, %6 : vector<8x256xbf16>
    %c0_102 = arith.constant 0 : index
    %c256_103 = arith.constant 256 : index
    %101 = vector.load %arg8[%c0_102, %c256_103] : memref<72x512xbf16, #tpu.memory_space<vmem>>, vector<8x256xbf16>
    tpu.vector_store %arg8[%c0_102, %c256_103], %100 {strides = array<i32>} : memref<72x512xbf16, #tpu.memory_space<vmem>>, vector<8x256xbf16>,
    %c0_104 = arith.constant 0 : index
    %c0_105 = arith.constant 0 : index
    %c112_106 = arith.constant 112 : index
    %102 = vector.load %arg9[%c0_104, %c0_105, %c112_106] : memref<2x8x512xbf16, #tpu.memory_space<vmem>>, vector<1x8x256xbf16>
    %103 = vector.shape_cast %102 : vector<1x8x256xbf16> to vector<8x256xbf16>
    %c8_107 = arith.constant 8 : index
    %c0_108 = arith.constant 0 : index
    %104 = vector.load %arg8[%c8_107, %c0_108] : memref<72x512xbf16, #tpu.memory_space<vmem>>, vector<8x256xbf16>
    tpu.vector_store %arg8[%c8_107, %c0_108], %103 {strides = array<i32>} : memref<72x512xbf16, #tpu.memory_space<vmem>>, vector<8x256xbf16>,
    %c1_109 = arith.constant 1 : index
    %c0_110 = arith.constant 0 : index
    %c112_111 = arith.constant 112 : index
    %105 = vector.load %arg9[%c1_109, %c0_110, %c112_111] : memref<2x8x512xbf16, #tpu.memory_space<vmem>>, vector<1x8x256xbf16>
    %106 = vector.shape_cast %105 : vector<1x8x256xbf16> to vector<8x256xbf16>
    %c8_112 = arith.constant 8 : index
    %c256_113 = arith.constant 256 : index
    %107 = vector.load %arg8[%c8_112, %c256_113] : memref<72x512xbf16, #tpu.memory_space<vmem>>, vector<8x256xbf16>
    tpu.vector_store %arg8[%c8_112, %c256_113], %106 {strides = array<i32>} : memref<72x512xbf16, #tpu.memory_space<vmem>>, vector<8x256xbf16>,
    %c0_114 = arith.constant 0 : index
    %c0_115 = arith.constant 0 : index
    %c113_116 = arith.constant 113 : index
    %108 = vector.load %arg9[%c0_114, %c0_115, %c113_116] : memref<2x8x512xbf16, #tpu.memory_space<vmem>>, vector<1x8x256xbf16>
    %109 = vector.shape_cast %108 : vector<1x8x256xbf16> to vector<8x256xbf16>
    %110 = arith.mulf %109, %9 : vector<8x256xbf16>
    %c16_117 = arith.constant 16 : index
    %c0_118 = arith.constant 0 : index
    %111 = vector.load %arg8[%c16_117, %c0_118] : memref<72x512xbf16, #tpu.memory_space<vmem>>, vector<8x256xbf16>
    tpu.vector_store %arg8[%c16_117, %c0_118], %110 {strides = array<i32>} : memref<72x512xbf16, #tpu.memory_space<vmem>>, vector<8x256xbf16>,
    %c1_119 = arith.constant 1 : index
    %c0_120 = arith.constant 0 : index
    %c113_121 = arith.constant 113 : index
    %112 = vector.load %arg9[%c1_119, %c0_120, %c113_121] : memref<2x8x512xbf16, #tpu.memory_space<vmem>>, vector<1x8x256xbf16>
    %113 = vector.shape_cast %112 : vector<1x8x256xbf16> to vector<8x256xbf16>
    %114 = arith.mulf %113, %9 : vector<8x256xbf16>
    %c16_122 = arith.constant 16 : index
    %c256_123 = arith.constant 256 : index
    %115 = vector.load %arg8[%c16_122, %c256_123] : memref<72x512xbf16, #tpu.memory_space<vmem>>, vector<8x256xbf16>
    tpu.vector_store %arg8[%c16_122, %c256_123], %114 {strides = array<i32>} : memref<72x512xbf16, #tpu.memory_space<vmem>>, vector<8x256xbf16>,
    %c0_124 = arith.constant 0 : index
    %c0_125 = arith.constant 0 : index
    %c127_126 = arith.constant 127 : index
    %116 = vector.load %arg9[%c0_124, %c0_125, %c127_126] : memref<2x8x512xbf16, #tpu.memory_space<vmem>>, vector<1x8x256xbf16>
    %117 = vector.shape_cast %116 : vector<1x8x256xbf16> to vector<8x256xbf16>
    %118 = arith.mulf %117, %6 : vector<8x256xbf16>
    %c24_127 = arith.constant 24 : index
    %c0_128 = arith.constant 0 : index
    %119 = vector.load %arg8[%c24_127, %c0_128] : memref<72x512xbf16, #tpu.memory_space<vmem>>, vector<8x256xbf16>
    tpu.vector_store %arg8[%c24_127, %c0_128], %118 {strides = array<i32>} : memref<72x512xbf16, #tpu.memory_space<vmem>>, vector<8x256xbf16>,
    %c1_129 = arith.constant 1 : index
    %c0_130 = arith.constant 0 : index
    %c127_131 = arith.constant 127 : index
    %120 = vector.load %arg9[%c1_129, %c0_130, %c127_131] : memref<2x8x512xbf16, #tpu.memory_space<vmem>>, vector<1x8x256xbf16>
    %121 = vector.shape_cast %120 : vector<1x8x256xbf16> to vector<8x256xbf16>
    %122 = arith.mulf %121, %6 : vector<8x256xbf16>
    %c24_132 = arith.constant 24 : index
    %c256_133 = arith.constant 256 : index
    %123 = vector.load %arg8[%c24_132, %c256_133] : memref<72x512xbf16, #tpu.memory_space<vmem>>, vector<8x256xbf16>
    tpu.vector_store %arg8[%c24_132, %c256_133], %122 {strides = array<i32>} : memref<72x512xbf16, #tpu.memory_space<vmem>>, vector<8x256xbf16>,
    %c0_134 = arith.constant 0 : index
    %c0_135 = arith.constant 0 : index
    %c128_136 = arith.constant 128 : index
    %124 = vector.load %arg9[%c0_134, %c0_135, %c128_136] : memref<2x8x512xbf16, #tpu.memory_space<vmem>>, vector<1x8x256xbf16>
    %125 = vector.shape_cast %124 : vector<1x8x256xbf16> to vector<8x256xbf16>
    %c32_137 = arith.constant 32 : index
    %c0_138 = arith.constant 0 : index
    %126 = vector.load %arg8[%c32_137, %c0_138] : memref<72x512xbf16, #tpu.memory_space<vmem>>, vector<8x256xbf16>
    tpu.vector_store %arg8[%c32_137, %c0_138], %125 {strides = array<i32>} : memref<72x512xbf16, #tpu.memory_space<vmem>>, vector<8x256xbf16>,
    %c1_139 = arith.constant 1 : index
    %c0_140 = arith.constant 0 : index
    %c128_141 = arith.constant 128 : index
    %127 = vector.load %arg9[%c1_139, %c0_140, %c128_141] : memref<2x8x512xbf16, #tpu.memory_space<vmem>>, vector<1x8x256xbf16>
    %128 = vector.shape_cast %127 : vector<1x8x256xbf16> to vector<8x256xbf16>
    %c32_142 = arith.constant 32 : index
    %c256_143 = arith.constant 256 : index
    %129 = vector.load %arg8[%c32_142, %c256_143] : memref<72x512xbf16, #tpu.memory_space<vmem>>, vector<8x256xbf16>
    tpu.vector_store %arg8[%c32_142, %c256_143], %128 {strides = array<i32>} : memref<72x512xbf16, #tpu.memory_space<vmem>>, vector<8x256xbf16>,
    %c0_144 = arith.constant 0 : index
    %c0_145 = arith.constant 0 : index
    %c129_146 = arith.constant 129 : index
    %130 = vector.load %arg9[%c0_144, %c0_145, %c129_146] : memref<2x8x512xbf16, #tpu.memory_space<vmem>>, vector<1x8x256xbf16>
    %131 = vector.shape_cast %130 : vector<1x8x256xbf16> to vector<8x256xbf16>
    %132 = arith.mulf %131, %9 : vector<8x256xbf16>
    %c40_147 = arith.constant 40 : index
    %c0_148 = arith.constant 0 : index
    %133 = vector.load %arg8[%c40_147, %c0_148] : memref<72x512xbf16, #tpu.memory_space<vmem>>, vector<8x256xbf16>
    tpu.vector_store %arg8[%c40_147, %c0_148], %132 {strides = array<i32>} : memref<72x512xbf16, #tpu.memory_space<vmem>>, vector<8x256xbf16>,
    %c1_149 = arith.constant 1 : index
    %c0_150 = arith.constant 0 : index
    %c129_151 = arith.constant 129 : index
    %134 = vector.load %arg9[%c1_149, %c0_150, %c129_151] : memref<2x8x512xbf16, #tpu.memory_space<vmem>>, vector<1x8x256xbf16>
    %135 = vector.shape_cast %134 : vector<1x8x256xbf16> to vector<8x256xbf16>
    %136 = arith.mulf %135, %9 : vector<8x256xbf16>
    %c40_152 = arith.constant 40 : index
    %c256_153 = arith.constant 256 : index
    %137 = vector.load %arg8[%c40_152, %c256_153] : memref<72x512xbf16, #tpu.memory_space<vmem>>, vector<8x256xbf16>
    tpu.vector_store %arg8[%c40_152, %c256_153], %136 {strides = array<i32>} : memref<72x512xbf16, #tpu.memory_space<vmem>>, vector<8x256xbf16>,
    %c0_154 = arith.constant 0 : index
    %c0_155 = arith.constant 0 : index
    %c143_156 = arith.constant 143 : index
    %138 = vector.load %arg9[%c0_154, %c0_155, %c143_156] : memref<2x8x512xbf16, #tpu.memory_space<vmem>>, vector<1x8x256xbf16>
    %139 = vector.shape_cast %138 : vector<1x8x256xbf16> to vector<8x256xbf16>
    %140 = arith.mulf %139, %6 : vector<8x256xbf16>
    %c48_157 = arith.constant 48 : index
    %c0_158 = arith.constant 0 : index
    %141 = vector.load %arg8[%c48_157, %c0_158] : memref<72x512xbf16, #tpu.memory_space<vmem>>, vector<8x256xbf16>
    tpu.vector_store %arg8[%c48_157, %c0_158], %140 {strides = array<i32>} : memref<72x512xbf16, #tpu.memory_space<vmem>>, vector<8x256xbf16>,
    %c1_159 = arith.constant 1 : index
    %c0_160 = arith.constant 0 : index
    %c143_161 = arith.constant 143 : index
    %142 = vector.load %arg9[%c1_159, %c0_160, %c143_161] : memref<2x8x512xbf16, #tpu.memory_space<vmem>>, vector<1x8x256xbf16>
    %143 = vector.shape_cast %142 : vector<1x8x256xbf16> to vector<8x256xbf16>
    %144 = arith.mulf %143, %6 : vector<8x256xbf16>
    %c48_162 = arith.constant 48 : index
    %c256_163 = arith.constant 256 : index
    %145 = vector.load %arg8[%c48_162, %c256_163] : memref<72x512xbf16, #tpu.memory_space<vmem>>, vector<8x256xbf16>
    tpu.vector_store %arg8[%c48_162, %c256_163], %144 {strides = array<i32>} : memref<72x512xbf16, #tpu.memory_space<vmem>>, vector<8x256xbf16>,
    %c0_164 = arith.constant 0 : index
    %c0_165 = arith.constant 0 : index
    %c144_166 = arith.constant 144 : index
    %146 = vector.load %arg9[%c0_164, %c0_165, %c144_166] : memref<2x8x512xbf16, #tpu.memory_space<vmem>>, vector<1x8x256xbf16>
    %147 = vector.shape_cast %146 : vector<1x8x256xbf16> to vector<8x256xbf16>
    %c56_167 = arith.constant 56 : index
    %c0_168 = arith.constant 0 : index
    %148 = vector.load %arg8[%c56_167, %c0_168] : memref<72x512xbf16, #tpu.memory_space<vmem>>, vector<8x256xbf16>
    tpu.vector_store %arg8[%c56_167, %c0_168], %147 {strides = array<i32>} : memref<72x512xbf16, #tpu.memory_space<vmem>>, vector<8x256xbf16>,
    %c1_169 = arith.constant 1 : index
    %c0_170 = arith.constant 0 : index
    %c144_171 = arith.constant 144 : index
    %149 = vector.load %arg9[%c1_169, %c0_170, %c144_171] : memref<2x8x512xbf16, #tpu.memory_space<vmem>>, vector<1x8x256xbf16>
    %150 = vector.shape_cast %149 : vector<1x8x256xbf16> to vector<8x256xbf16>
    %c56_172 = arith.constant 56 : index
    %c256_173 = arith.constant 256 : index
    %151 = vector.load %arg8[%c56_172, %c256_173] : memref<72x512xbf16, #tpu.memory_space<vmem>>, vector<8x256xbf16>
    tpu.vector_store %arg8[%c56_172, %c256_173], %150 {strides = array<i32>} : memref<72x512xbf16, #tpu.memory_space<vmem>>, vector<8x256xbf16>,
    %c0_174 = arith.constant 0 : index
    %c0_175 = arith.constant 0 : index
    %c145_176 = arith.constant 145 : index
    %152 = vector.load %arg9[%c0_174, %c0_175, %c145_176] : memref<2x8x512xbf16, #tpu.memory_space<vmem>>, vector<1x8x256xbf16>
    %153 = vector.shape_cast %152 : vector<1x8x256xbf16> to vector<8x256xbf16>
    %154 = arith.mulf %153, %9 : vector<8x256xbf16>
    %c64_177 = arith.constant 64 : index
    %c0_178 = arith.constant 0 : index
    %155 = vector.load %arg8[%c64_177, %c0_178] : memref<72x512xbf16, #tpu.memory_space<vmem>>, vector<8x256xbf16>
    tpu.vector_store %arg8[%c64_177, %c0_178], %154 {strides = array<i32>} : memref<72x512xbf16, #tpu.memory_space<vmem>>, vector<8x256xbf16>,
    %c1_179 = arith.constant 1 : index
    %c0_180 = arith.constant 0 : index
    %c145_181 = arith.constant 145 : index
    %156 = vector.load %arg9[%c1_179, %c0_180, %c145_181] : memref<2x8x512xbf16, #tpu.memory_space<vmem>>, vector<1x8x256xbf16>
    %157 = vector.shape_cast %156 : vector<1x8x256xbf16> to vector<8x256xbf16>
    %158 = arith.mulf %157, %9 : vector<8x256xbf16>
    %c64_182 = arith.constant 64 : index
    %c256_183 = arith.constant 256 : index
    %159 = vector.load %arg8[%c64_182, %c256_183] : memref<72x512xbf16, #tpu.memory_space<vmem>>, vector<8x256xbf16>
    tpu.vector_store %arg8[%c64_182, %c256_183], %158 {strides = array<i32>} : memref<72x512xbf16, #tpu.memory_space<vmem>>, vector<8x256xbf16>,
    %c0_184 = arith.constant 0 : index
    %c0_185 = arith.constant 0 : index
    %160 = vector.load %arg5[%c0_184, %c0_185] : memref<8x72xbf16, #tpu.memory_space<vmem>>, vector<8x72xbf16>
    %c0_186 = arith.constant 0 : index
    %c0_187 = arith.constant 0 : index
    %161 = vector.load %arg8[%c0_186, %c0_187] : memref<72x512xbf16, #tpu.memory_space<vmem>>, vector<72x512xbf16>
    %cst_188 = arith.constant dense<0.000000e+00> : vector<8x512xf32>
    %162 = tpu.matmul %160, %161, %cst_188 {dimension_numbers = #tpu.dot_dimension_numbers<[1], [0], [0], [1], [0, 0, 1, 1], [], []>} : vector<8x72xbf16>, vector<72x512xbf16>, vector<8x512xf32> -> vector<8x512xf32>
    %c0_189 = arith.constant 0 : index
    %c0_190 = arith.constant 0 : index
    %163 = vector.load %arg6[%c0_189, %c0_190] : memref<8x1xf32, #tpu.memory_space<vmem>>, vector<8x1xf32>
    %164 = vector.broadcast %163 : vector<8x1xf32> to vector<8x512xf32>
    %165 = arith.addf %162, %164 : vector<8x512xf32>
    %c0_191 = arith.constant 0 : index
    %c0_192 = arith.constant 0 : index
    %c128_193 = arith.constant 128 : index
    %166 = vector.load %arg1[%c0_191, %c0_192, %c128_193] : memref<2x8x512xbf16, #tpu.memory_space<vmem>>, vector<1x8x256xbf16>
    %167 = vector.shape_cast %166 : vector<1x8x256xbf16> to vector<8x256xbf16>
    %168 = arith.extf %167 : vector<8x256xbf16> to vector<8x256xf32>
    %169 = vector.extract_strided_slice %165 {offsets = [0, 0], sizes = [8, 256], strides = [1, 1]} : vector<8x512xf32> to vector<8x256xf32>
    %170 = arith.addf %169, %168 : vector<8x256xf32>
    %cst_194 = arith.constant 0.000000e+00 : f32
    %171 = vector.broadcast %cst_194 : f32 to vector<8x256xf32>
    %172 = arith.maximumf %170, %171 : vector<8x256xf32>
    %173 = arith.truncf %172 : vector<8x256xf32> to vector<8x256xbf16>
    %c0_195 = arith.constant 0 : index
    %c0_196 = arith.constant 0 : index
    %c0_197 = arith.constant 0 : index
    %174 = vector.load %arg7[%c0_195, %c0_196, %c0_197] : memref<2x8x256xbf16, #tpu.memory_space<vmem>>, vector<1x8x256xbf16>
    %175 = vector.shape_cast %174 : vector<1x8x256xbf16> to vector<8x256xbf16>
    %176 = vector.shape_cast %173 : vector<8x256xbf16> to vector<1x8x256xbf16>
    tpu.vector_store %arg7[%c0_195, %c0_196, %c0_197], %176 {strides = array<i32>} : memref<2x8x256xbf16, #tpu.memory_space<vmem>>, vector<1x8x256xbf16>,
    %c1_198 = arith.constant 1 : index
    %c0_199 = arith.constant 0 : index
    %c128_200 = arith.constant 128 : index
    %177 = vector.load %arg1[%c1_198, %c0_199, %c128_200] : memref<2x8x512xbf16, #tpu.memory_space<vmem>>, vector<1x8x256xbf16>
    %178 = vector.shape_cast %177 : vector<1x8x256xbf16> to vector<8x256xbf16>
    %179 = arith.extf %178 : vector<8x256xbf16> to vector<8x256xf32>
    %180 = vector.extract_strided_slice %165 {offsets = [0, 256], sizes = [8, 256], strides = [1, 1]} : vector<8x512xf32> to vector<8x256xf32>
    %181 = arith.addf %180, %179 : vector<8x256xf32>
    %cst_201 = arith.constant 0.000000e+00 : f32
    %182 = vector.broadcast %cst_201 : f32 to vector<8x256xf32>
    %183 = arith.maximumf %181, %182 : vector<8x256xf32>
    %184 = arith.truncf %183 : vector<8x256xf32> to vector<8x256xbf16>
    %c1_202 = arith.constant 1 : index
    %c0_203 = arith.constant 0 : index
    %c0_204 = arith.constant 0 : index
    %185 = vector.load %arg7[%c1_202, %c0_203, %c0_204] : memref<2x8x256xbf16, #tpu.memory_space<vmem>>, vector<1x8x256xbf16>
    %186 = vector.shape_cast %185 : vector<1x8x256xbf16> to vector<8x256xbf16>
    %187 = vector.shape_cast %184 : vector<8x256xbf16> to vector<1x8x256xbf16>
    tpu.vector_store %arg7[%c1_202, %c0_203, %c0_204], %187 {strides = array<i32>} : memref<2x8x256xbf16, #tpu.memory_space<vmem>>, vector<1x8x256xbf16>,
    return
  }
  func.func @transform_0(%arg0: i32) -> (i32, i32, i32) {
    %c0_i32 = arith.constant 0 : i32
    %c0_i32_0 = arith.constant 0 : i32
    %c0_i32_1 = arith.constant 0 : i32
    return %arg0, %c0_i32, %c0_i32_0 : i32, i32, i32
  }
  func.func @transform_1(%arg0: i32) -> (i32, i32) {
    %c0_i32 = arith.constant 0 : i32
    %c0_i32_0 = arith.constant 0 : i32
    %c0_i32_1 = arith.constant 0 : i32
    return %c0_i32, %c0_i32_0 : i32, i32
  }
  func.func @transform_2(%arg0: i32) -> (i32, i32) {
    %c0_i32 = arith.constant 0 : i32
    %c0_i32_0 = arith.constant 0 : i32
    %c0_i32_1 = arith.constant 0 : i32
    return %c0_i32, %c0_i32_0 : i32, i32
  }
  func.func @transform_3(%arg0: i32) -> (i32, i32) {
    %c0_i32 = arith.constant 0 : i32
    %c0_i32_0 = arith.constant 0 : i32
    %c0_i32_1 = arith.constant 0 : i32
    return %c0_i32, %c0_i32_0 : i32, i32
  }
  func.func @transform_4(%arg0: i32) -> (i32, i32) {
    %c0_i32 = arith.constant 0 : i32
    %c0_i32_0 = arith.constant 0 : i32
    %c0_i32_1 = arith.constant 0 : i32
    return %c0_i32, %c0_i32_0 : i32, i32
  }
  func.func @transform_5(%arg0: i32) -> (i32, i32) {
    %c0_i32 = arith.constant 0 : i32
    %c0_i32_0 = arith.constant 0 : i32
    %c0_i32_1 = arith.constant 0 : i32
    return %c0_i32, %c0_i32_0 : i32, i32
  }
  func.func @transform_6(%arg0: i32) -> (i32, i32, i32) {
    %c0_i32 = arith.constant 0 : i32
    %c0_i32_0 = arith.constant 0 : i32
    %c0_i32_1 = arith.constant 0 : i32
    return %arg0, %c0_i32, %c0_i32_0 : i32, i32, i32
  }
}

</mosaic_0001>

<llo_original>
// kernel: tpu_custom_call.1
$region0: #{tpu_custom_call.1}
  #allocation0 [shape = 'u32[]', space=smem, size = 0x4, offset = 0x4, fixed_abs, tag = 'smem constant byte address 0x4 - core index']
  #allocation1 [shape = 'u32[144,128]{1,0:T(1,128)}', space=vmem, size = 0x12000, scoped, tag = 'internal scratch']
  #allocation2 [shape = 'bf16[72,512]{1,0:T(8,128)(2,1)}', space=vmem, size = 0x12000, scoped, tag = 'scratch operand']
  #allocation3 [shape = 'bf16[2,8,512]{2,1,0:T(8,128)(2,1)}', space=vmem, size = 0x4000, scoped, tag = 'scratch operand']
  %s0 = inlined_call_operand.hbm [shape: bf16[2,8,512], index: 0, kind: input, shape index: {}]
  %s1 = inlined_call_operand.vmem [shape: bf16[2,256], index: 1, kind: input, shape index: {}]
  %s2 = inlined_call_operand.vmem [shape: bf16[8,72], index: 2, kind: input, shape index: {}]
  %s3 = inlined_call_operand.vmem [shape: f32[8,1], index: 3, kind: input, shape index: {}]
  %s4 = inlined_call_operand.vmem [shape: bf16[8,72], index: 4, kind: input, shape index: {}]
  %s5 = inlined_call_operand.vmem [shape: f32[8,1], index: 5, kind: input, shape index: {}]
  %s6 = inlined_call_operand.hbm [shape: bf16[2,8,256], index: 6, kind: output, shape index: {}]
  %s7 = sld [smem:[#allocation0]]
  $region38: #{tpu_custom_call.1} parent=0
    _
  %s9 = ssub.s32 1, %s7
  %s10 = scalar_select 0, %s9, %s7
  $region1: #{tpu_custom_call.1} parent=0
    #allocation4 [shape = 'u8[16384]{0}', space=vmem, size = 0x4000, scoped, tag = 'input window, operand 0, single buffered']
    #allocation5 [shape = 's32[1]{0}', space=sflag, size = 0x4, scoped, tag = 'scoped memory for tpu_custom_call.1']
    #allocation6 [shape = 's32[1]{0}', space=sflag, size = 0x4, scoped, tag = 'scoped memory for tpu_custom_call.1']
    #allocation7 [shape = 'u8[8192]{0}', space=vmem, size = 0x2000, scoped, tag = 'output window, operand 0, single buffered']
    %11 = vsyncpa [#allocation5], 0
    %12 = vsyncpa [#allocation6], 0
    // Predicated region
    $region2: #{tpu_custom_call.1} parent=1 // pred_check
      _
    $region3: #{tpu_custom_call.1} parent=1 // pred_check_branch
      %14 = sbr.rel (0) target = $region5
    $region4: #{tpu_custom_call.1} parent=1 // pred_region
      %s16 = ssub.s32 512, 512
      %17 = vsyncadd [#allocation5], %s16
      %s18 = sshll.u32 [#allocation4], 4
      %s19 = int_to_ptr.vmem [resolvable:$true] %s18
      %24 = dma.hbm_to_vmem [thread:$0]  %s0, 512, %s19, [#allocation5], 256, 256, 16
    $region5: #{tpu_custom_call.1} parent=1 // pred_fallthru
      _
    // Predicated region
    $region6: #{tpu_custom_call.1} parent=1 // pred_check
      _
    $region7: #{tpu_custom_call.1} parent=1 // pred_check_branch
      %26 = sbr.rel (0) target = $region9
    $region8: #{tpu_custom_call.1} parent=1 // pred_region
      _
    $region9: #{tpu_custom_call.1} parent=1 // pred_fallthru
      _
    // Predicated region
    $region10: #{tpu_custom_call.1} parent=1 // pred_check
      _
    $region11: #{tpu_custom_call.1} parent=1 // pred_check_branch
      %28 = sbr.rel (0) target = $region13
    $region12: #{tpu_custom_call.1} parent=1 // pred_region
      _
    $region13: #{tpu_custom_call.1} parent=1 // pred_fallthru
      _
    // Predicated region
    $region14: #{tpu_custom_call.1} parent=1 // pred_check
      _
    $region15: #{tpu_custom_call.1} parent=1 // pred_check_branch
      %30 = sbr.rel (0) target = $region17
    $region16: #{tpu_custom_call.1} parent=1 // pred_region
      _
    $region17: #{tpu_custom_call.1} parent=1 // pred_fallthru
      _
    // Predicated region
    $region18: #{tpu_custom_call.1} parent=1 // pred_check
      _
    $region19: #{tpu_custom_call.1} parent=1 // pred_check_branch
      %32 = sbr.rel (0) target = $region21
    $region20: #{tpu_custom_call.1} parent=1 // pred_region
      _
    $region21: #{tpu_custom_call.1} parent=1 // pred_fallthru
      _
    // Predicated region
    $region22: #{tpu_custom_call.1} parent=1 // pred_check
      _
    $region23: #{tpu_custom_call.1} parent=1 // pred_check_branch
      %34 = sbr.rel (0) target = $region25
    $region24: #{tpu_custom_call.1} parent=1 // pred_region
      _
    $region25: #{tpu_custom_call.1} parent=1 // pred_fallthru
      _
    // Predicated region
    $region26: #{tpu_custom_call.1} parent=1 // pred_check
      _
    $region27: #{tpu_custom_call.1} parent=1 // pred_check_branch
      %36 = sbr.rel (0) target = $region29
    $region28: #{tpu_custom_call.1} parent=1 // pred_region
      %37 = dma.done [#allocation5], 512
    $region29: #{tpu_custom_call.1} parent=1 // pred_fallthru
      _
    %39 = vst [vmem:[#allocation3] sm:$0xf] 0
    %40 = vst [vmem:[#allocation3 + $0x10] sm:$0xf] 0
    %41 = vst [vmem:[#allocation3 + $0xc] sm:$0xf] 0
    %42 = vst [vmem:[#allocation3 + $0x1c] sm:$0xf] 0
    %v43 = vld [vmem:[%s1] sm:$0x3]
    %v46 = vunpack.c.l.s4 1966171168
    %v47 = vunpack.c.0.s8 %v46
    %v48 = vlaneseq
    %v49 = vshrl.u32 %v48, 7
    %v50 = vsub.s32 %v47, %v49
    %v51 = vrot.slane %v43, %v50
    %v52 = vcombine.high %v51, %v51
    %v54 = vunpack.c.l.s4 1966171168
    %v55 = vunpack.c.0.s8 %v54
    %v56 = vlaneseq
    %v57 = vshrl.u32 %v56, 7
    %v58 = vsub.s32 %v55, %v57
    %v59 = vrot.slane %v51, %v58
    %v61 = vunpack.c.l.s4 1966171168
    %v62 = vunpack.c.0.s8 %v61
    %v63 = vlaneseq
    %v64 = vshrl.u32 %v63, 7
    %v65 = vsub.s32 %v62, %v64
    %v66 = vrot.slane %v52, %v65
    %v68 = vpack.i.b16 %v59, %v59
    %v70 = vlaneseq
    %v71 = vshrl.u32 %v70, 7
    %v72 = vsub.s32 0, %v71
    %v73 = vrot.slane %v68, %v72
    %v75 = vpack.i.b16 %v66, %v66
    %v77 = vlaneseq
    %v78 = vshrl.u32 %v77, 7
    %v79 = vsub.s32 0, %v78
    %v80 = vrot.slane %v75, %v79
    %v81 = vshrl.u32 %v59, 16
    %v82 = vpack.i.b16 %v81, %v81
    %v84 = vlaneseq
    %v85 = vshrl.u32 %v84, 7
    %v86 = vsub.s32 0, %v85
    %v87 = vrot.slane %v82, %v86
    %v88 = vshrl.u32 %v66, 16
    %v89 = vpack.i.b16 %v88, %v88
    %v91 = vlaneseq
    %v92 = vshrl.u32 %v91, 7
    %v93 = vsub.s32 0, %v92
    %v94 = vrot.slane %v89, %v93
    %v95 = vld [vmem:[#allocation4] sm:$0xff]
    %v96 = vld [vmem:[#allocation4 + $0x8] sm:$0xf]
    %v99 = vunpack.c.l.b16 %v73
    %v100 = vunpack.c.l.b16 %v80
    %v101 = vpack.c.b16 %v100, %v99
    %102 = vrot.lane.b32.xlu0 %v101, 111
    %v103 = vpop.permute.xlu0 %102
    %v104 = vrot.slane %v103, 4
    %vm105 = vcmask 908288
    %v106 = vsel %vm105, %v104, %v103
    %v109 = vmul.bf16 %v95, %v106
    %v110 = vmul.bf16 %v96, %v104
    %113 = vrot.lane.b32.xlu0 %v109, 17
    %v114 = vpop.permute.xlu0 %113
    %115 = vrot.lane.b32.xlu0 %v110, 17
    %v116 = vpop.permute.xlu0 %115
    %v117 = vrot.slane %v114, 4
    %v118 = vrot.slane %v116, 4
    %vm119 = vcmask 1043456
    %v120 = vsel %vm119, %v117, %v118
    %vm121 = vcmask 138240
    %v122 = vsel %vm121, %v114, %v120
    %124 = vst [vmem:[#allocation2] sm:$0xff] %v122
    %s125 = scalar_lea.vmem [#allocation4], 16
    %v126 = vld [vmem:[%s125] sm:$0xff]
    %v127 = vld [vmem:[%s125 + $0x8] sm:$0xf]
    %v128 = vmul.bf16 %v126, %v106
    %v129 = vmul.bf16 %v127, %v104
    %132 = vrot.lane.b32.xlu0 %v128, 17
    %v133 = vpop.permute.xlu0 %132
    %134 = vrot.lane.b32.xlu0 %v129, 17
    %v135 = vpop.permute.xlu0 %134
    %v136 = vrot.slane %v133, 4
    %v137 = vrot.slane %v135, 4
    %v138 = vsel %vm119, %v136, %v137
    %v139 = vsel %vm121, %v133, %v138
    %141 = vst [vmem:[#allocation2 + $0x8] sm:$0xff] %v139
    %v142 = vld [vmem:[#allocation4] sm:$0xff]
    %v143 = vld [vmem:[#allocation4 + $0x8] sm:$0xf]
    %146 = vrot.lane.b32.xlu0 %v142, 16
    %v147 = vpop.permute.xlu0 %146
    %148 = vrot.lane.b32.xlu0 %v143, 16
    %v149 = vpop.permute.xlu0 %148
    %v150 = vrot.slane %v147, 4
    %v151 = vrot.slane %v149, 4
    %v152 = vsel %vm119, %v150, %v151
    %vm153 = vcmask 130048
    %v154 = vsel %vm153, %v147, %v152
    %156 = vst [vmem:[#allocation2 + $0x10] sm:$0xff] %v154
    %v157 = vld [vmem:[%s125] sm:$0xff]
    %v158 = vld [vmem:[%s125 + $0x8] sm:$0xf]
    %161 = vrot.lane.b32.xlu0 %v157, 16
    %v162 = vpop.permute.xlu0 %161
    %163 = vrot.lane.b32.xlu0 %v158, 16
    %v164 = vpop.permute.xlu0 %163
    %v165 = vrot.slane %v162, 4
    %v166 = vrot.slane %v164, 4
    %v167 = vsel %vm119, %v165, %v166
    %v168 = vsel %vm153, %v162, %v167
    %170 = vst [vmem:[#allocation2 + $0x18] sm:$0xff] %v168
    %v171 = vld [vmem:[#allocation4] sm:$0xff]
    %v172 = vld [vmem:[#allocation4 + $0x8] sm:$0xf]
    %v175 = vunpack.c.l.b16 %v87
    %v176 = vunpack.c.l.b16 %v94
    %v177 = vpack.c.b16 %v176, %v175
    %178 = vrot.lane.b32.xlu0 %v177, 113
    %v179 = vpop.permute.xlu0 %178
    %v180 = vrot.slane %v179, 4
    %vm181 = vcmask 924672
    %v182 = vsel %vm181, %v180, %v179
    %v185 = vmul.bf16 %v171, %v182
    %v186 = vmul.bf16 %v172, %v180
    %189 = vrot.lane.b32.xlu0 %v185, 15
    %v190 = vpop.permute.xlu0 %189
    %191 = vrot.lane.b32.xlu0 %v186, 15
    %v192 = vpop.permute.xlu0 %191
    %v193 = vrot.slane %v190, 4
    %v194 = vrot.slane %v192, 4
    %v195 = vsel %vm119, %v193, %v194
    %vm196 = vcmask 121856
    %v197 = vsel %vm196, %v190, %v195
    %199 = vst [vmem:[#allocation2 + $0x20] sm:$0xff] %v197
    %v200 = vld [vmem:[%s125] sm:$0xff]
    %v201 = vld [vmem:[%s125 + $0x8] sm:$0xf]
    %v202 = vmul.bf16 %v200, %v182
    %v203 = vmul.bf16 %v201, %v180
    %206 = vrot.lane.b32.xlu0 %v202, 15
    %v207 = vpop.permute.xlu0 %206
    %208 = vrot.lane.b32.xlu0 %v203, 15
    %v209 = vpop.permute.xlu0 %208
    %v210 = vrot.slane %v207, 4
    %v211 = vrot.slane %v209, 4
    %v212 = vsel %vm119, %v210, %v211
    %v213 = vsel %vm196, %v207, %v212
    %215 = vst [vmem:[#allocation2 + $0x28] sm:$0xff] %v213
    %v216 = vld [vmem:[#allocation4] sm:$0xff]
    %v217 = vld [vmem:[#allocation4 + $0x8] sm:$0xf]
    %218 = vrot.lane.b32.xlu0 %v101, 127
    %v219 = vpop.permute.xlu0 %218
    %v220 = vrot.slane %v219, 4
    %vm221 = vcmask 1039360
    %v222 = vsel %vm221, %v220, %v219
    %v225 = vmul.bf16 %v216, %v222
    %v226 = vmul.bf16 %v217, %v220
    %229 = vrot.lane.b32.xlu0 %v225, 1
    %v230 = vpop.permute.xlu0 %229
    %231 = vrot.lane.b32.xlu0 %v226, 1
    %v232 = vpop.permute.xlu0 %231
    %v233 = vrot.slane %v230, 4
    %v234 = vrot.slane %v232, 4
    %v235 = vsel %vm119, %v233, %v234
    %vm236 = vcmask 7168
    %v237 = vsel %vm236, %v230, %v235
    %239 = vst [vmem:[#allocation2 + $0x30] sm:$0xff] %v237
    %v240 = vld [vmem:[%s125] sm:$0xff]
    %v241 = vld [vmem:[%s125 + $0x8] sm:$0xf]
    %v242 = vmul.bf16 %v240, %v222
    %v243 = vmul.bf16 %v241, %v220
    %246 = vrot.lane.b32.xlu0 %v242, 1
    %v247 = vpop.permute.xlu0 %246
    %248 = vrot.lane.b32.xlu0 %v243, 1
    %v249 = vpop.permute.xlu0 %248
    %v250 = vrot.slane %v247, 4
    %v251 = vrot.slane %v249, 4
    %v252 = vsel %vm119, %v250, %v251
    %v253 = vsel %vm236, %v247, %v252
    %255 = vst [vmem:[#allocation2 + $0x38] sm:$0xff] %v253
    %v256 = vld [vmem:[#allocation4 + $0x4] sm:$0xff]
    %257 = vst [vmem:[#allocation2 + $0x40] sm:$0xff] %v256
    %v258 = vld [vmem:[%s125 + $0x4] sm:$0xff]
    %259 = vst [vmem:[#allocation2 + $0x48] sm:$0xff] %v258
    %v260 = vld [vmem:[#allocation4 + $0x4] sm:$0xff]
    %v261 = vld [vmem:[#allocation4 + $0xc] sm:$0xf]
    %262 = vrot.lane.b32.xlu0 %v177, 1
    %v263 = vpop.permute.xlu0 %262
    %v264 = vrot.slane %v263, 4
    %v265 = vsel %vm236, %v264, %v263
    %v268 = vmul.bf16 %v260, %v265
    %v269 = vmul.bf16 %v261, %v264
    %272 = vrot.lane.b32.xlu0 %v268, 127
    %v273 = vpop.permute.xlu0 %272
    %274 = vrot.lane.b32.xlu0 %v269, 127
    %v275 = vpop.permute.xlu0 %274
    %v276 = vrot.slane %v273, 4
    %v277 = vrot.slane %v275, 4
    %v278 = vsel %vm119, %v276, %v277
    %v279 = vsel %vm221, %v273, %v278
    %281 = vst [vmem:[#allocation2 + $0x50] sm:$0xff] %v279
    %v282 = vld [vmem:[%s125 + $0x4] sm:$0xff]
    %v283 = vld [vmem:[%s125 + $0xc] sm:$0xf]
    %v284 = vmul.bf16 %v282, %v265
    %v285 = vmul.bf16 %v283, %v264
    %288 = vrot.lane.b32.xlu0 %v284, 127
    %v289 = vpop.permute.xlu0 %288
    %290 = vrot.lane.b32.xlu0 %v285, 127
    %v291 = vpop.permute.xlu0 %290
    %v292 = vrot.slane %v289, 4
    %v293 = vrot.slane %v291, 4
    %v294 = vsel %vm119, %v292, %v293
    %v295 = vsel %vm221, %v289, %v294
    %297 = vst [vmem:[#allocation2 + $0x58] sm:$0xff] %v295
    %v298 = vld [vmem:[#allocation4 + $0x4] sm:$0xff]
    %v299 = vld [vmem:[#allocation4 + $0xc] sm:$0xf]
    %300 = vrot.lane.b32.xlu0 %v101, 15
    %v301 = vpop.permute.xlu0 %300
    %v302 = vrot.slane %v301, 4
    %v303 = vsel %vm196, %v302, %v301
    %v306 = vmul.bf16 %v298, %v303
    %v307 = vmul.bf16 %v299, %v302
    %310 = vrot.lane.b32.xlu0 %v306, 113
    %v311 = vpop.permute.xlu0 %310
    %312 = vrot.lane.b32.xlu0 %v307, 113
    %v313 = vpop.permute.xlu0 %312
    %v314 = vrot.slane %v311, 4
    %v315 = vrot.slane %v313, 4
    %v316 = vsel %vm119, %v314, %v315
    %v317 = vsel %vm181, %v311, %v316
    %319 = vst [vmem:[#allocation2 + $0x60] sm:$0xff] %v317
    %v320 = vld [vmem:[%s125 + $0x4] sm:$0xff]
    %v321 = vld [vmem:[%s125 + $0xc] sm:$0xf]
    %v322 = vmul.bf16 %v320, %v303
    %v323 = vmul.bf16 %v321, %v302
    %326 = vrot.lane.b32.xlu0 %v322, 113
    %v327 = vpop.permute.xlu0 %326
    %328 = vrot.lane.b32.xlu0 %v323, 113
    %v329 = vpop.permute.xlu0 %328
    %v330 = vrot.slane %v327, 4
    %v331 = vrot.slane %v329, 4
    %v332 = vsel %vm119, %v330, %v331
    %v333 = vsel %vm181, %v327, %v332
    %335 = vst [vmem:[#allocation2 + $0x68] sm:$0xff] %v333
    %v336 = vld [vmem:[#allocation4 + $0x4] sm:$0xff]
    %v337 = vld [vmem:[#allocation4 + $0xc] sm:$0xf]
    %340 = vrot.lane.b32.xlu0 %v336, 112
    %v341 = vpop.permute.xlu0 %340
    %342 = vrot.lane.b32.xlu0 %v337, 112
    %v343 = vpop.permute.xlu0 %342
    %v344 = vrot.slane %v341, 4
    %v345 = vrot.slane %v343, 4
    %v346 = vsel %vm119, %v344, %v345
    %vm347 = vcmask 916480
    %v348 = vsel %vm347, %v341, %v346
    %350 = vst [vmem:[#allocation2 + $0x70] sm:$0xff] %v348
    %v351 = vld [vmem:[%s125 + $0x4] sm:$0xff]
    %v352 = vld [vmem:[%s125 + $0xc] sm:$0xf]
    %355 = vrot.lane.b32.xlu0 %v351, 112
    %v356 = vpop.permute.xlu0 %355
    %357 = vrot.lane.b32.xlu0 %v352, 112
    %v358 = vpop.permute.xlu0 %357
    %v359 = vrot.slane %v356, 4
    %v360 = vrot.slane %v358, 4
    %v361 = vsel %vm119, %v359, %v360
    %v362 = vsel %vm347, %v356, %v361
    %364 = vst [vmem:[#allocation2 + $0x78] sm:$0xff] %v362
    %v365 = vld [vmem:[#allocation4 + $0x4] sm:$0xff]
    %v366 = vld [vmem:[#allocation4 + $0xc] sm:$0xf]
    %367 = vrot.lane.b32.xlu0 %v177, 17
    %v368 = vpop.permute.xlu0 %367
    %v369 = vrot.slane %v368, 4
    %v370 = vsel %vm121, %v369, %v368
    %v373 = vmul.bf16 %v365, %v370
    %v374 = vmul.bf16 %v366, %v369
    %377 = vrot.lane.b32.xlu0 %v373, 111
    %v378 = vpop.permute.xlu0 %377
    %379 = vrot.lane.b32.xlu0 %v374, 111
    %v380 = vpop.permute.xlu0 %379
    %v381 = vrot.slane %v378, 4
    %v382 = vrot.slane %v380, 4
    %v383 = vsel %vm119, %v381, %v382
    %v384 = vsel %vm105, %v378, %v383
    %386 = vst [vmem:[#allocation2 + $0x80] sm:$0xff] %v384
    %v387 = vld [vmem:[%s125 + $0x4] sm:$0xff]
    %v388 = vld [vmem:[%s125 + $0xc] sm:$0xf]
    %v389 = vmul.bf16 %v387, %v370
    %v390 = vmul.bf16 %v388, %v369
    %393 = vrot.lane.b32.xlu0 %v389, 111
    %v394 = vpop.permute.xlu0 %393
    %395 = vrot.lane.b32.xlu0 %v390, 111
    %v396 = vpop.permute.xlu0 %395
    %v397 = vrot.slane %v394, 4
    %v398 = vrot.slane %v396, 4
    %v399 = vsel %vm119, %v397, %v398
    %v400 = vsel %vm105, %v394, %v399
    %402 = vst [vmem:[#allocation2 + $0x88] sm:$0xff] %v400
    %v403 = vld [vmem:[%s2] sm:$0xf]
    %v404 = vld [vmem:[#allocation2] sm:$0xff]
    %v405 = vld [vmem:[#allocation2 + $0x8] sm:$0xff]
    %v406 = vld [vmem:[#allocation2 + $0x10] sm:$0xff]
    %v407 = vld [vmem:[#allocation2 + $0x18] sm:$0xff]
    %v408 = vld [vmem:[#allocation2 + $0x20] sm:$0xff]
    %v409 = vld [vmem:[#allocation2 + $0x28] sm:$0xff]
    %v410 = vld [vmem:[#allocation2 + $0x30] sm:$0xff]
    %v411 = vld [vmem:[#allocation2 + $0x38] sm:$0xff]
    %v412 = vld [vmem:[#allocation2 + $0x40] sm:$0xff]
    %v413 = vld [vmem:[#allocation2 + $0x48] sm:$0xff]
    %v414 = vld [vmem:[#allocation2 + $0x50] sm:$0xff]
    %v415 = vld [vmem:[#allocation2 + $0x58] sm:$0xff]
    %v416 = vld [vmem:[#allocation2 + $0x60] sm:$0xff]
    %v417 = vld [vmem:[#allocation2 + $0x68] sm:$0xff]
    %v418 = vld [vmem:[#allocation2 + $0x70] sm:$0xff]
    %v419 = vld [vmem:[#allocation2 + $0x78] sm:$0xff]
    %v420 = vld [vmem:[#allocation2 + $0x80] sm:$0xff]
    %v421 = vld [vmem:[#allocation2 + $0x88] sm:$0xff]
    %v422 = vld [vmem:[%s3] sm:$0xff]
    %424 = vset.pattern.permute.xlu0 0
    %425 = vperm.xlu0 %424, %v422
    %v426 = vpop.permute.xlu0 %425
    %v446 = vunpack.c.l.b16 %v404
    %v447 = vunpack.c.h.b16 %v404
    %v448 = vunpack.c.l.b16 %v405
    %v449 = vunpack.c.h.b16 %v405
    %v450 = vunpack.c.l.b16 %v406
    %v451 = vunpack.c.h.b16 %v406
    %v452 = vunpack.c.l.b16 %v407
    %v453 = vunpack.c.h.b16 %v407
    %v454 = vunpack.c.l.b16 %v408
    %v455 = vunpack.c.h.b16 %v408
    %v456 = vunpack.c.l.b16 %v409
    %v457 = vunpack.c.h.b16 %v409
    %v458 = vunpack.c.l.b16 %v410
    %v459 = vunpack.c.h.b16 %v410
    %v460 = vunpack.c.l.b16 %v411
    %v461 = vunpack.c.h.b16 %v411
    %v462 = vunpack.c.l.b16 %v412
    %v463 = vunpack.c.h.b16 %v412
    %v464 = vunpack.c.l.b16 %v413
    %v465 = vunpack.c.h.b16 %v413
    %v466 = vunpack.c.l.b16 %v414
    %v467 = vunpack.c.h.b16 %v414
    %v468 = vunpack.c.l.b16 %v415
    %v469 = vunpack.c.h.b16 %v415
    %v470 = vunpack.c.l.b16 %v416
    %v471 = vunpack.c.h.b16 %v416
    %v472 = vunpack.c.l.b16 %v417
    %v473 = vunpack.c.h.b16 %v417
    %v474 = vunpack.c.l.b16 %v418
    %v475 = vunpack.c.h.b16 %v418
    %v476 = vunpack.c.l.b16 %v419
    %v477 = vunpack.c.h.b16 %v419
    %v478 = vunpack.c.l.b16 %v420
    %v479 = vunpack.c.h.b16 %v420
    %v480 = vunpack.c.l.b16 %v421
    %v481 = vunpack.c.h.b16 %v421
    %v482 = vpack.c.b16 %v450, %v446
    %v483 = vpack.c.b16 %v451, %v447
    %v484 = vpack.c.b16 %v452, %v448
    %v485 = vpack.c.b16 %v453, %v449
    %v486 = vpack.c.b16 %v458, %v454
    %v487 = vpack.c.b16 %v459, %v455
    %v488 = vpack.c.b16 %v460, %v456
    %v489 = vpack.c.b16 %v461, %v457
    %v490 = vpack.c.b16 %v466, %v462
    %v491 = vpack.c.b16 %v467, %v463
    %v492 = vpack.c.b16 %v468, %v464
    %v493 = vpack.c.b16 %v469, %v465
    %v494 = vpack.c.b16 %v474, %v470
    %v495 = vpack.c.b16 %v475, %v471
    %v496 = vpack.c.b16 %v476, %v472
    %v497 = vpack.c.b16 %v477, %v473
    %v498 = vpack.c.b16 %v478, %v478
    %v499 = vpack.c.b16 %v479, %v479
    %v500 = vpack.c.b16 %v480, %v480
    %v501 = vpack.c.b16 %v481, %v481
    %vm518 = vcmask 588800
    %v520 = vsel %vm518, %v403, 0
    %vm522 = vcmask 1043456
    %v524 = vsel %vm522, %v498, 0
    %v527 = vsel %vm522, %v499, 0
    %v530 = vsel %vm522, %v500, 0
    %v533 = vsel %vm522, %v501, 0
    %535 = vmatprep.subr.bf16.mxu0 0
    %536 = vmatpush1.bf16.msra.mxu0 0
    %537 = vmatprep.subr.bf16.mxu0 0
    %538 = vmatpush1.bf16.msra.mxu0 0
    %539 = vmatprep.subr.bf16.mxu0 0
    %540 = vmatpush1.bf16.msra.mxu0 0
    %541 = vmatprep.subr.bf16.mxu0 %v527
    %542 = vmatpush1.bf16.msra.mxu0 %v524
    %543 = vmatprep.subr.bf16.mxu0 %v495
    %544 = vmatpush1.bf16.msra.mxu0 %v494
    %545 = vmatprep.subr.bf16.mxu0 %v491
    %546 = vmatpush1.bf16.msra.mxu0 %v490
    %547 = vmatprep.subr.bf16.mxu0 %v487
    %548 = vmatpush1.bf16.msra.mxu0 %v486
    %549 = vmatprep.subr.bf16.mxu0 %v483
    %550 = vmatpush1.bf16.msra.mxu0 %v482
    %551 = vmatprep.subr.bf16.mxu0 0
    %552 = vmatpush2.bf16.msra.mxu0 0
    %553 = vmatprep.subr.bf16.mxu0 0
    %554 = vmatpush2.bf16.msra.mxu0 0
    %555 = vmatprep.subr.bf16.mxu0 0
    %556 = vmatpush2.bf16.msra.mxu0 0
    %557 = vmatprep.subr.bf16.mxu0 0
    %558 = vmatpush2.bf16.msra.mxu0 0
    %559 = vmatprep.subr.bf16.mxu0 0
    %560 = vmatpush2.bf16.msra.mxu0 0
    %561 = vmatprep.subr.bf16.mxu0 0
    %562 = vmatpush2.bf16.msra.mxu0 0
    %563 = vmatprep.subr.bf16.mxu0 0
    %564 = vmatpush2.bf16.msra.mxu0 0
    %565 = vmatprep.subr.bf16.mxu0 0
    %566 = vmatpush2.bf16.msra.mxu0 0
    %567 = vmatprep.mubr.bf16.mxu0 0
    %568 = vmatmul.mubr.bf16.gmra.mxu0 %v520
    %v569 = vpop.f32.mrf.mxu0
    %v570 = vadd.f32 %v426, %v569
    %v571 = vpop.f32.mrf.mxu0
    %v572 = vadd.f32 %v426, %v571
    %v573 = vpop.f32.mrf.mxu0
    %v574 = vpop.f32.mrf.mxu0
    %575 = vdwg.mxu0
    %576 = vmatprep.subr.bf16.mxu0 0
    %577 = vmatpush1.bf16.msra.mxu0 0
    %578 = vmatprep.subr.bf16.mxu0 0
    %579 = vmatpush1.bf16.msra.mxu0 0
    %580 = vmatprep.subr.bf16.mxu0 0
    %581 = vmatpush1.bf16.msra.mxu0 0
    %582 = vmatprep.subr.bf16.mxu0 %v533
    %583 = vmatpush1.bf16.msra.mxu0 %v530
    %584 = vmatprep.subr.bf16.mxu0 %v497
    %585 = vmatpush1.bf16.msra.mxu0 %v496
    %586 = vmatprep.subr.bf16.mxu0 %v493
    %587 = vmatpush1.bf16.msra.mxu0 %v492
    %588 = vmatprep.subr.bf16.mxu0 %v489
    %589 = vmatpush1.bf16.msra.mxu0 %v488
    %590 = vmatprep.subr.bf16.mxu0 %v485
    %591 = vmatpush1.bf16.msra.mxu0 %v484
    %592 = vmatprep.subr.bf16.mxu0 0
    %593 = vmatpush2.bf16.msra.mxu0 0
    %594 = vmatprep.subr.bf16.mxu0 0
    %595 = vmatpush2.bf16.msra.mxu0 0
    %596 = vmatprep.subr.bf16.mxu0 0
    %597 = vmatpush2.bf16.msra.mxu0 0
    %598 = vmatprep.subr.bf16.mxu0 0
    %599 = vmatpush2.bf16.msra.mxu0 0
    %600 = vmatprep.subr.bf16.mxu0 0
    %601 = vmatpush2.bf16.msra.mxu0 0
    %602 = vmatprep.subr.bf16.mxu0 0
    %603 = vmatpush2.bf16.msra.mxu0 0
    %604 = vmatprep.subr.bf16.mxu0 0
    %605 = vmatpush2.bf16.msra.mxu0 0
    %606 = vmatprep.subr.bf16.mxu0 0
    %607 = vmatpush2.bf16.msra.mxu0 0
    %608 = vmatprep.mubr.bf16.mxu0 0
    %609 = vmatmul.mubr.bf16.gmra.mxu0 %v520
    %v610 = vpop.f32.mrf.mxu0
    %v611 = vadd.f32 %v426, %v610
    %v612 = vpop.f32.mrf.mxu0
    %v613 = vadd.f32 %v426, %v612
    %v614 = vpop.f32.mrf.mxu0
    %v615 = vpop.f32.mrf.mxu0
    %616 = vdwg.mxu0
    %v617 = vmax.f32 %v570, 0.0
    %v618 = vmax.f32 %v572, 0.0
    %v619 = vmax.f32 %v611, 0.0
    %v620 = vmax.f32 %v613, 0.0
    %v621 = vpack.c.bf16 %v617, %v617
    %v622 = vpack.c.bf16 %v618, %v618
    %v625 = vunpack.c.l.b16 %v621
    %v626 = vunpack.c.l.b16 %v622
    %v627 = vpack.c.b16 %v626, %v625
    %629 = vst [vmem:[#allocation3 + $0x4] sm:$0xff] %v627
    %v630 = vpack.c.bf16 %v619, %v619
    %v631 = vpack.c.bf16 %v620, %v620
    %v634 = vunpack.c.l.b16 %v630
    %v635 = vunpack.c.l.b16 %v631
    %v636 = vpack.c.b16 %v635, %v634
    %s638 = scalar_lea.vmem [#allocation3], 16
    %639 = vst [vmem:[%s638 + $0x4] sm:$0xff] %v636
    %v640 = vld [vmem:[#allocation3] sm:$0xff]
    %v641 = vld [vmem:[#allocation3 + $0x8] sm:$0xf]
    %v642 = vmul.bf16 %v640, %v106
    %v643 = vmul.bf16 %v641, %v104
    %646 = vrot.lane.b32.xlu0 %v642, 17
    %v647 = vpop.permute.xlu0 %646
    %648 = vrot.lane.b32.xlu0 %v643, 17
    %v649 = vpop.permute.xlu0 %648
    %v650 = vrot.slane %v647, 4
    %v651 = vrot.slane %v649, 4
    %v652 = vsel %vm119, %v650, %v651
    %v653 = vsel %vm121, %v647, %v652
    %655 = vst [vmem:[#allocation2] sm:$0xff] %v653
    %v656 = vld [vmem:[%s638] sm:$0xff]
    %v657 = vld [vmem:[%s638 + $0x8] sm:$0xf]
    %v658 = vmul.bf16 %v656, %v106
    %v659 = vmul.bf16 %v657, %v104
    %662 = vrot.lane.b32.xlu0 %v658, 17
    %v663 = vpop.permute.xlu0 %662
    %664 = vrot.lane.b32.xlu0 %v659, 17
    %v665 = vpop.permute.xlu0 %664
    %v666 = vrot.slane %v663, 4
    %v667 = vrot.slane %v665, 4
    %v668 = vsel %vm119, %v666, %v667
    %v669 = vsel %vm121, %v663, %v668
    %671 = vst [vmem:[#allocation2 + $0x8] sm:$0xff] %v669
    %v672 = vld [vmem:[#allocation3] sm:$0xff]
    %v673 = vld [vmem:[#allocation3 + $0x8] sm:$0xf]
    %676 = vrot.lane.b32.xlu0 %v672, 16
    %v677 = vpop.permute.xlu0 %676
    %678 = vrot.lane.b32.xlu0 %v673, 16
    %v679 = vpop.permute.xlu0 %678
    %v680 = vrot.slane %v677, 4
    %v681 = vrot.slane %v679, 4
    %v682 = vsel %vm119, %v680, %v681
    %v683 = vsel %vm153, %v677, %v682
    %685 = vst [vmem:[#allocation2 + $0x10] sm:$0xff] %v683
    %v686 = vld [vmem:[%s638] sm:$0xff]
    %v687 = vld [vmem:[%s638 + $0x8] sm:$0xf]
    %690 = vrot.lane.b32.xlu0 %v686, 16
    %v691 = vpop.permute.xlu0 %690
    %692 = vrot.lane.b32.xlu0 %v687, 16
    %v693 = vpop.permute.xlu0 %692
    %v694 = vrot.slane %v691, 4
    %v695 = vrot.slane %v693, 4
    %v696 = vsel %vm119, %v694, %v695
    %v697 = vsel %vm153, %v691, %v696
    %699 = vst [vmem:[#allocation2 + $0x18] sm:$0xff] %v697
    %v700 = vld [vmem:[#allocation3] sm:$0xff]
    %v701 = vld [vmem:[#allocation3 + $0x8] sm:$0xf]
    %v702 = vmul.bf16 %v700, %v182
    %v703 = vmul.bf16 %v701, %v180
    %706 = vrot.lane.b32.xlu0 %v702, 15
    %v707 = vpop.permute.xlu0 %706
    %708 = vrot.lane.b32.xlu0 %v703, 15
    %v709 = vpop.permute.xlu0 %708
    %v710 = vrot.slane %v707, 4
    %v711 = vrot.slane %v709, 4
    %v712 = vsel %vm119, %v710, %v711
    %v713 = vsel %vm196, %v707, %v712
    %715 = vst [vmem:[#allocation2 + $0x20] sm:$0xff] %v713
    %v716 = vld [vmem:[%s638] sm:$0xff]
    %v717 = vld [vmem:[%s638 + $0x8] sm:$0xf]
    %v718 = vmul.bf16 %v716, %v182
    %v719 = vmul.bf16 %v717, %v180
    %722 = vrot.lane.b32.xlu0 %v718, 15
    %v723 = vpop.permute.xlu0 %722
    %724 = vrot.lane.b32.xlu0 %v719, 15
    %v725 = vpop.permute.xlu0 %724
    %v726 = vrot.slane %v723, 4
    %v727 = vrot.slane %v725, 4
    %v728 = vsel %vm119, %v726, %v727
    %v729 = vsel %vm196, %v723, %v728
    %731 = vst [vmem:[#allocation2 + $0x28] sm:$0xff] %v729
    %v732 = vld [vmem:[#allocation3] sm:$0xff]
    %v733 = vld [vmem:[#allocation3 + $0x8] sm:$0xf]
    %v734 = vmul.bf16 %v732, %v222
    %v735 = vmul.bf16 %v733, %v220
    %738 = vrot.lane.b32.xlu0 %v734, 1
    %v739 = vpop.permute.xlu0 %738
    %740 = vrot.lane.b32.xlu0 %v735, 1
    %v741 = vpop.permute.xlu0 %740
    %v742 = vrot.slane %v739, 4
    %v743 = vrot.slane %v741, 4
    %v744 = vsel %vm119, %v742, %v743
    %v745 = vsel %vm236, %v739, %v744
    %747 = vst [vmem:[#allocation2 + $0x30] sm:$0xff] %v745
    %v748 = vld [vmem:[%s638] sm:$0xff]
    %v749 = vld [vmem:[%s638 + $0x8] sm:$0xf]
    %v750 = vmul.bf16 %v748, %v222
    %v751 = vmul.bf16 %v749, %v220
    %754 = vrot.lane.b32.xlu0 %v750, 1
    %v755 = vpop.permute.xlu0 %754
    %756 = vrot.lane.b32.xlu0 %v751, 1
    %v757 = vpop.permute.xlu0 %756
    %v758 = vrot.slane %v755, 4
    %v759 = vrot.slane %v757, 4
    %v760 = vsel %vm119, %v758, %v759
    %v761 = vsel %vm236, %v755, %v760
    %763 = vst [vmem:[#allocation2 + $0x38] sm:$0xff] %v761
    %v764 = vld [vmem:[#allocation3 + $0x4] sm:$0xff]
    %765 = vst [vmem:[#allocation2 + $0x40] sm:$0xff] %v764
    %v766 = vld [vmem:[%s638 + $0x4] sm:$0xff]
    %767 = vst [vmem:[#allocation2 + $0x48] sm:$0xff] %v766
    %v768 = vld [vmem:[#allocation3 + $0x4] sm:$0xff]
    %v769 = vld [vmem:[#allocation3 + $0xc] sm:$0xf]
    %v770 = vmul.bf16 %v768, %v265
    %v771 = vmul.bf16 %v769, %v264
    %774 = vrot.lane.b32.xlu0 %v770, 127
    %v775 = vpop.permute.xlu0 %774
    %776 = vrot.lane.b32.xlu0 %v771, 127
    %v777 = vpop.permute.xlu0 %776
    %v778 = vrot.slane %v775, 4
    %v779 = vrot.slane %v777, 4
    %v780 = vsel %vm119, %v778, %v779
    %v781 = vsel %vm221, %v775, %v780
    %783 = vst [vmem:[#allocation2 + $0x50] sm:$0xff] %v781
    %v784 = vld [vmem:[%s638 + $0x4] sm:$0xff]
    %v785 = vld [vmem:[%s638 + $0xc] sm:$0xf]
    %v786 = vmul.bf16 %v784, %v265
    %v787 = vmul.bf16 %v785, %v264
    %790 = vrot.lane.b32.xlu0 %v786, 127
    %v791 = vpop.permute.xlu0 %790
    %792 = vrot.lane.b32.xlu0 %v787, 127
    %v793 = vpop.permute.xlu0 %792
    %v794 = vrot.slane %v791, 4
    %v795 = vrot.slane %v793, 4
    %v796 = vsel %vm119, %v794, %v795
    %v797 = vsel %vm221, %v791, %v796
    %799 = vst [vmem:[#allocation2 + $0x58] sm:$0xff] %v797
    %v800 = vld [vmem:[#allocation3 + $0x4] sm:$0xff]
    %v801 = vld [vmem:[#allocation3 + $0xc] sm:$0xf]
    %v802 = vmul.bf16 %v800, %v303
    %v803 = vmul.bf16 %v801, %v302
    %806 = vrot.lane.b32.xlu0 %v802, 113
    %v807 = vpop.permute.xlu0 %806
    %808 = vrot.lane.b32.xlu0 %v803, 113
    %v809 = vpop.permute.xlu0 %808
    %v810 = vrot.slane %v807, 4
    %v811 = vrot.slane %v809, 4
    %v812 = vsel %vm119, %v810, %v811
    %v813 = vsel %vm181, %v807, %v812
    %815 = vst [vmem:[#allocation2 + $0x60] sm:$0xff] %v813
    %v816 = vld [vmem:[%s638 + $0x4] sm:$0xff]
    %v817 = vld [vmem:[%s638 + $0xc] sm:$0xf]
    %v818 = vmul.bf16 %v816, %v303
    %v819 = vmul.bf16 %v817, %v302
    %822 = vrot.lane.b32.xlu0 %v818, 113
    %v823 = vpop.permute.xlu0 %822
    %824 = vrot.lane.b32.xlu0 %v819, 113
    %v825 = vpop.permute.xlu0 %824
    %v826 = vrot.slane %v823, 4
    %v827 = vrot.slane %v825, 4
    %v828 = vsel %vm119, %v826, %v827
    %v829 = vsel %vm181, %v823, %v828
    %831 = vst [vmem:[#allocation2 + $0x68] sm:$0xff] %v829
    %v832 = vld [vmem:[#allocation3 + $0x4] sm:$0xff]
    %v833 = vld [vmem:[#allocation3 + $0xc] sm:$0xf]
    %836 = vrot.lane.b32.xlu0 %v832, 112
    %v837 = vpop.permute.xlu0 %836
    %838 = vrot.lane.b32.xlu0 %v833, 112
    %v839 = vpop.permute.xlu0 %838
    %v840 = vrot.slane %v837, 4
    %v841 = vrot.slane %v839, 4
    %v842 = vsel %vm119, %v840, %v841
    %v843 = vsel %vm347, %v837, %v842
    %845 = vst [vmem:[#allocation2 + $0x70] sm:$0xff] %v843
    %v846 = vld [vmem:[%s638 + $0x4] sm:$0xff]
    %v847 = vld [vmem:[%s638 + $0xc] sm:$0xf]
    %850 = vrot.lane.b32.xlu0 %v846, 112
    %v851 = vpop.permute.xlu0 %850
    %852 = vrot.lane.b32.xlu0 %v847, 112
    %v853 = vpop.permute.xlu0 %852
    %v854 = vrot.slane %v851, 4
    %v855 = vrot.slane %v853, 4
    %v856 = vsel %vm119, %v854, %v855
    %v857 = vsel %vm347, %v851, %v856
    %859 = vst [vmem:[#allocation2 + $0x78] sm:$0xff] %v857
    %v860 = vld [vmem:[#allocation3 + $0x4] sm:$0xff]
    %v861 = vld [vmem:[#allocation3 + $0xc] sm:$0xf]
    %v862 = vmul.bf16 %v860, %v370
    %v863 = vmul.bf16 %v861, %v369
    %866 = vrot.lane.b32.xlu0 %v862, 111
    %v867 = vpop.permute.xlu0 %866
    %868 = vrot.lane.b32.xlu0 %v863, 111
    %v869 = vpop.permute.xlu0 %868
    %v870 = vrot.slane %v867, 4
    %v871 = vrot.slane %v869, 4
    %v872 = vsel %vm119, %v870, %v871
    %v873 = vsel %vm105, %v867, %v872
    %875 = vst [vmem:[#allocation2 + $0x80] sm:$0xff] %v873
    %v876 = vld [vmem:[%s638 + $0x4] sm:$0xff]
    %v877 = vld [vmem:[%s638 + $0xc] sm:$0xf]
    %v878 = vmul.bf16 %v876, %v370
    %v879 = vmul.bf16 %v877, %v369
    %882 = vrot.lane.b32.xlu0 %v878, 111
    %v883 = vpop.permute.xlu0 %882
    %884 = vrot.lane.b32.xlu0 %v879, 111
    %v885 = vpop.permute.xlu0 %884
    %v886 = vrot.slane %v883, 4
    %v887 = vrot.slane %v885, 4
    %v888 = vsel %vm119, %v886, %v887
    %v889 = vsel %vm105, %v883, %v888
    %891 = vst [vmem:[#allocation2 + $0x88] sm:$0xff] %v889
    %v892 = vld [vmem:[%s4] sm:$0xf]
    %v893 = vld [vmem:[#allocation2] sm:$0xff]
    %v894 = vld [vmem:[#allocation2 + $0x8] sm:$0xff]
    %v895 = vld [vmem:[#allocation2 + $0x10] sm:$0xff]
    %v896 = vld [vmem:[#allocation2 + $0x18] sm:$0xff]
    %v897 = vld [vmem:[#allocation2 + $0x20] sm:$0xff]
    %v898 = vld [vmem:[#allocation2 + $0x28] sm:$0xff]
    %v899 = vld [vmem:[#allocation2 + $0x30] sm:$0xff]
    %v900 = vld [vmem:[#allocation2 + $0x38] sm:$0xff]
    %v901 = vld [vmem:[#allocation2 + $0x40] sm:$0xff]
    %v902 = vld [vmem:[#allocation2 + $0x48] sm:$0xff]
    %v903 = vld [vmem:[#allocation2 + $0x50] sm:$0xff]
    %v904 = vld [vmem:[#allocation2 + $0x58] sm:$0xff]
    %v905 = vld [vmem:[#allocation2 + $0x60] sm:$0xff]
    %v906 = vld [vmem:[#allocation2 + $0x68] sm:$0xff]
    %v907 = vld [vmem:[#allocation2 + $0x70] sm:$0xff]
    %v908 = vld [vmem:[#allocation2 + $0x78] sm:$0xff]
    %v909 = vld [vmem:[#allocation2 + $0x80] sm:$0xff]
    %v910 = vld [vmem:[#allocation2 + $0x88] sm:$0xff]
    %v911 = vld [vmem:[%s5] sm:$0xff]
    %913 = vset.pattern.permute.xlu0 0
    %914 = vperm.xlu0 %913, %v911
    %v915 = vpop.permute.xlu0 %914
    %v935 = vunpack.c.l.b16 %v893
    %v936 = vunpack.c.h.b16 %v893
    %v937 = vunpack.c.l.b16 %v894
    %v938 = vunpack.c.h.b16 %v894
    %v939 = vunpack.c.l.b16 %v895
    %v940 = vunpack.c.h.b16 %v895
    %v941 = vunpack.c.l.b16 %v896
    %v942 = vunpack.c.h.b16 %v896
    %v943 = vunpack.c.l.b16 %v897
    %v944 = vunpack.c.h.b16 %v897
    %v945 = vunpack.c.l.b16 %v898
    %v946 = vunpack.c.h.b16 %v898
    %v947 = vunpack.c.l.b16 %v899
    %v948 = vunpack.c.h.b16 %v899
    %v949 = vunpack.c.l.b16 %v900
    %v950 = vunpack.c.h.b16 %v900
    %v951 = vunpack.c.l.b16 %v901
    %v952 = vunpack.c.h.b16 %v901
    %v953 = vunpack.c.l.b16 %v902
    %v954 = vunpack.c.h.b16 %v902
    %v955 = vunpack.c.l.b16 %v903
    %v956 = vunpack.c.h.b16 %v903
    %v957 = vunpack.c.l.b16 %v904
    %v958 = vunpack.c.h.b16 %v904
    %v959 = vunpack.c.l.b16 %v905
    %v960 = vunpack.c.h.b16 %v905
    %v961 = vunpack.c.l.b16 %v906
    %v962 = vunpack.c.h.b16 %v906
    %v963 = vunpack.c.l.b16 %v907
    %v964 = vunpack.c.h.b16 %v907
    %v965 = vunpack.c.l.b16 %v908
    %v966 = vunpack.c.h.b16 %v908
    %v967 = vunpack.c.l.b16 %v909
    %v968 = vunpack.c.h.b16 %v909
    %v969 = vunpack.c.l.b16 %v910
    %v970 = vunpack.c.h.b16 %v910
    %v971 = vpack.c.b16 %v939, %v935
    %v972 = vpack.c.b16 %v940, %v936
    %v973 = vpack.c.b16 %v941, %v937
    %v974 = vpack.c.b16 %v942, %v938
    %v975 = vpack.c.b16 %v947, %v943
    %v976 = vpack.c.b16 %v948, %v944
    %v977 = vpack.c.b16 %v949, %v945
    %v978 = vpack.c.b16 %v950, %v946
    %v979 = vpack.c.b16 %v955, %v951
    %v980 = vpack.c.b16 %v956, %v952
    %v981 = vpack.c.b16 %v957, %v953
    %v982 = vpack.c.b16 %v958, %v954
    %v983 = vpack.c.b16 %v963, %v959
    %v984 = vpack.c.b16 %v964, %v960
    %v985 = vpack.c.b16 %v965, %v961
    %v986 = vpack.c.b16 %v966, %v962
    %v987 = vpack.c.b16 %v967, %v967
    %v988 = vpack.c.b16 %v968, %v968
    %v989 = vpack.c.b16 %v969, %v969
    %v990 = vpack.c.b16 %v970, %v970
    %v1008 = vsel %vm518, %v892, 0
    %v1011 = vsel %vm522, %v987, 0
    %v1014 = vsel %vm522, %v988, 0
    %v1017 = vsel %vm522, %v989, 0
    %v1020 = vsel %vm522, %v990, 0
    %1022 = vmatprep.subr.bf16.mxu0 0
    %1023 = vmatpush1.bf16.msra.mxu0 0
    %1024 = vmatprep.subr.bf16.mxu0 0
    %1025 = vmatpush1.bf16.msra.mxu0 0
    %1026 = vmatprep.subr.bf16.mxu0 0
    %1027 = vmatpush1.bf16.msra.mxu0 0
    %1028 = vmatprep.subr.bf16.mxu0 %v1014
    %1029 = vmatpush1.bf16.msra.mxu0 %v1011
    %1030 = vmatprep.subr.bf16.mxu0 %v984
    %1031 = vmatpush1.bf16.msra.mxu0 %v983
    %1032 = vmatprep.subr.bf16.mxu0 %v980
    %1033 = vmatpush1.bf16.msra.mxu0 %v979
    %1034 = vmatprep.subr.bf16.mxu0 %v976
    %1035 = vmatpush1.bf16.msra.mxu0 %v975
    %1036 = vmatprep.subr.bf16.mxu0 %v972
    %1037 = vmatpush1.bf16.msra.mxu0 %v971
    %1038 = vmatprep.subr.bf16.mxu0 0
    %1039 = vmatpush2.bf16.msra.mxu0 0
    %1040 = vmatprep.subr.bf16.mxu0 0
    %1041 = vmatpush2.bf16.msra.mxu0 0
    %1042 = vmatprep.subr.bf16.mxu0 0
    %1043 = vmatpush2.bf16.msra.mxu0 0
    %1044 = vmatprep.subr.bf16.mxu0 0
    %1045 = vmatpush2.bf16.msra.mxu0 0
    %1046 = vmatprep.subr.bf16.mxu0 0
    %1047 = vmatpush2.bf16.msra.mxu0 0
    %1048 = vmatprep.subr.bf16.mxu0 0
    %1049 = vmatpush2.bf16.msra.mxu0 0
    %1050 = vmatprep.subr.bf16.mxu0 0
    %1051 = vmatpush2.bf16.msra.mxu0 0
    %1052 = vmatprep.subr.bf16.mxu0 0
    %1053 = vmatpush2.bf16.msra.mxu0 0
    %1054 = vmatprep.mubr.bf16.mxu0 0
    %1055 = vmatmul.mubr.bf16.gmra.mxu0 %v1008
    %v1056 = vpop.f32.mrf.mxu0
    %v1057 = vadd.f32 %v915, %v1056
    %v1058 = vpop.f32.mrf.mxu0
    %v1059 = vadd.f32 %v915, %v1058
    %v1060 = vpop.f32.mrf.mxu0
    %v1061 = vpop.f32.mrf.mxu0
    %1062 = vdwg.mxu0
    %1063 = vmatprep.subr.bf16.mxu0 0
    %1064 = vmatpush1.bf16.msra.mxu0 0
    %1065 = vmatprep.subr.bf16.mxu0 0
    %1066 = vmatpush1.bf16.msra.mxu0 0
    %1067 = vmatprep.subr.bf16.mxu0 0
    %1068 = vmatpush1.bf16.msra.mxu0 0
    %1069 = vmatprep.subr.bf16.mxu0 %v1020
    %1070 = vmatpush1.bf16.msra.mxu0 %v1017
    %1071 = vmatprep.subr.bf16.mxu0 %v986
    %1072 = vmatpush1.bf16.msra.mxu0 %v985
    %1073 = vmatprep.subr.bf16.mxu0 %v982
    %1074 = vmatpush1.bf16.msra.mxu0 %v981
    %1075 = vmatprep.subr.bf16.mxu0 %v978
    %1076 = vmatpush1.bf16.msra.mxu0 %v977
    %1077 = vmatprep.subr.bf16.mxu0 %v974
    %1078 = vmatpush1.bf16.msra.mxu0 %v973
    %1079 = vmatprep.subr.bf16.mxu0 0
    %1080 = vmatpush2.bf16.msra.mxu0 0
    %1081 = vmatprep.subr.bf16.mxu0 0
    %1082 = vmatpush2.bf16.msra.mxu0 0
    %1083 = vmatprep.subr.bf16.mxu0 0
    %1084 = vmatpush2.bf16.msra.mxu0 0
    %1085 = vmatprep.subr.bf16.mxu0 0
    %1086 = vmatpush2.bf16.msra.mxu0 0
    %1087 = vmatprep.subr.bf16.mxu0 0
    %1088 = vmatpush2.bf16.msra.mxu0 0
    %1089 = vmatprep.subr.bf16.mxu0 0
    %1090 = vmatpush2.bf16.msra.mxu0 0
    %1091 = vmatprep.subr.bf16.mxu0 0
    %1092 = vmatpush2.bf16.msra.mxu0 0
    %1093 = vmatprep.subr.bf16.mxu0 0
    %1094 = vmatpush2.bf16.msra.mxu0 0
    %1095 = vmatprep.mubr.bf16.mxu0 0
    %1096 = vmatmul.mubr.bf16.gmra.mxu0 %v1008
    %v1097 = vpop.f32.mrf.mxu0
    %v1098 = vadd.f32 %v915, %v1097
    %v1099 = vpop.f32.mrf.mxu0
    %v1100 = vadd.f32 %v915, %v1099
    %v1101 = vpop.f32.mrf.mxu0
    %v1102 = vpop.f32.mrf.mxu0
    %1103 = vdwg.mxu0
    %v1104 = vld [vmem:[#allocation4 + $0x4] sm:$0xff]
    %v1105 = vunpack.c.l.bf16 %v1104
    %v1106 = vunpack.c.h.bf16 %v1104
    %v1107 = vadd.f32 %v1057, %v1105
    %v1108 = vadd.f32 %v1059, %v1106
    %v1109 = vmax.f32 %v1107, 0.0
    %v1110 = vmax.f32 %v1108, 0.0
    %v1111 = vpack.c.bf16 %v1109, %v1109
    %v1112 = vpack.c.bf16 %v1110, %v1110
    %v1115 = vunpack.c.l.b16 %v1111
    %v1116 = vunpack.c.l.b16 %v1112
    %v1117 = vpack.c.b16 %v1116, %v1115
    %1119 = vst [vmem:[#allocation7] sm:$0xff] %v1117
    %v1120 = vld [vmem:[%s125 + $0x4] sm:$0xff]
    %v1121 = vunpack.c.l.bf16 %v1120
    %v1122 = vunpack.c.h.bf16 %v1120
    %v1123 = vadd.f32 %v1098, %v1121
    %v1124 = vadd.f32 %v1100, %v1122
    %v1125 = vmax.f32 %v1123, 0.0
    %v1126 = vmax.f32 %v1124, 0.0
    %v1127 = vpack.c.bf16 %v1125, %v1125
    %v1128 = vpack.c.bf16 %v1126, %v1126
    %v1131 = vunpack.c.l.b16 %v1127
    %v1132 = vunpack.c.l.b16 %v1128
    %v1133 = vpack.c.b16 %v1132, %v1131
    %s1135 = scalar_lea.vmem [#allocation7], 8
    %1136 = vst [vmem:[%s1135] sm:$0xff] %v1133
    // Predicated region
    $region30: #{tpu_custom_call.1} parent=1 // pred_check
      _
    $region31: #{tpu_custom_call.1} parent=1 // pred_check_branch
      %1138 = sbr.rel (0) target = $region33
    $region32: #{tpu_custom_call.1} parent=1 // pred_region
      %s1140 = ssub.s32 256, 256
      %1141 = vsyncadd [#allocation6], %s1140
      %s1142 = sshll.u32 [#allocation7], 4
      %s1143 = int_to_ptr.vmem [resolvable:$true] %s1142
      %1148 = dma.vmem_to_hbm [thread:$0]  %s1143, 256, %s6, [#allocation6], 128, 128, 8
    $region33: #{tpu_custom_call.1} parent=1 // pred_fallthru
      _
    // Predicated region
    $region34: #{tpu_custom_call.1} parent=1 // pred_check
      _
    $region35: #{tpu_custom_call.1} parent=1 // pred_check_branch
      %1150 = sbr.rel (0) target = $region37
    $region36: #{tpu_custom_call.1} parent=1 // pred_region
      %1151 = dma.done [#allocation6], 256
    $region37: #{tpu_custom_call.1} parent=1 // pred_fallthru
      _
    %1152 = vsyncpa [#allocation5], 1
    %1153 = vsyncpa [#allocation6], 1

</llo_original>
